<compile_context>
chip_gen: v6e
topology: v6e:2x2x1
jax: 0.10.0
libtpu: 0.0.40
codegen_flags: <defaults>
</compile_context>

<pallas_src>
import functools

import jax
import jax.numpy as jnp
from jax import lax
from jax.experimental import pallas as pl
from jax.experimental.pallas import tpu as pltpu

# Contract the shared (last) axis of both operands directly: A @ B^T form,
# consumed natively by the MXU without relayouting a transposed operand.
_NT = (((1,), (1,)), ((), ()))


def _grdl_kernel(nig_ref, batch_ref, feat_ref, w_ref, b_ref, atoms_ref,
                 out_ref, *, num_supp):
    f32 = jnp.float32
    neg_inv_gamma = nig_ref[0]                                         # -1/gamma

    # --- extractor (synthetic stand-in: single Linear layer) ---
    x = jnp.dot(feat_ref[...], w_ref[...],
                preferred_element_type=f32) + b_ref[...]               # (N, D)
    a = atoms_ref[...]                                                 # (CS, D)

    n_nodes, d = x.shape
    cs = a.shape[0]
    num_atoms, num_graphs = out_ref.shape
    s = num_supp

    # --- pooling matrices built in-kernel (no extra HBM inputs / DMAs) ---
    # A[i, g] = 1/|graph g| if node i belongs to graph g.
    g_iota = lax.broadcasted_iota(jnp.int32, (n_nodes, num_graphs), 1)
    onehot = (batch_ref[...] == g_iota).astype(f32)                    # (N, G)
    counts = jnp.sum(onehot, axis=0, keepdims=True)                    # (1, G)
    A = onehot * pl.reciprocal(counts, approx=False)                   # (N, G)

    # Pt[c, i] = 1 if support row i belongs to atom c (static indicator).
    supp_iota = lax.broadcasted_iota(jnp.int32, (num_atoms, cs), 1)
    atom_iota = lax.broadcasted_iota(jnp.int32, (num_atoms, cs), 0)
    Pt = jnp.logical_and(supp_iota >= atom_iota * s,
                         supp_iota < (atom_iota + 1) * s).astype(f32)  # (C, CS)

    eye_c = (lax.broadcasted_iota(jnp.int32, (num_atoms, num_atoms), 0) ==
             lax.broadcasted_iota(jnp.int32, (num_atoms, num_atoms), 1)
             ).astype(f32)                                             # (C, C)

    # --- squared norms in both orientations, no transposes ---
    ones_col = jnp.ones((d, 1), dtype=f32)
    ones_row = jnp.ones((1, d), dtype=f32)
    x2 = x * x
    a2 = a * a
    x_sq_col = jnp.dot(x2, ones_col, preferred_element_type=f32)       # (N, 1)
    x_sq_row = lax.dot_general(ones_row, x2, _NT,
                               preferred_element_type=f32)             # (1, N)
    a_sq_col = jnp.dot(a2, ones_col, preferred_element_type=f32)       # (CS,1)
    a_sq_row = lax.dot_general(ones_row, a2, _NT,
                               preferred_element_type=f32)             # (1,CS)

    # --- k_xx ;  xx[g] = diag(A^T k_xx A)[g]  as a (1, G) row ---
    d_xx = x_sq_col + x_sq_row - 2.0 * lax.dot_general(
        x, x, _NT, preferred_element_type=f32)                         # (N, N)
    k_xx = jnp.exp(d_xx * neg_inv_gamma)
    kA = jnp.dot(k_xx, A, preferred_element_type=f32)                  # (N, G)
    xx_row = jnp.sum(A * kA, axis=0, keepdims=True)                    # (1, G)

    # --- k_xy ;  xy[c, g] = mean_s (k_xy @ A)[c*S+s, g]  as (C, G) ---
    d_xy = a_sq_col + x_sq_row - 2.0 * lax.dot_general(
        a, x, _NT, preferred_element_type=f32)                         # (CS, N)
    k_xy = jnp.exp(d_xy * neg_inv_gamma)
    kxyA = jnp.dot(k_xy, A, preferred_element_type=f32)                # (CS, G)
    xy_cg = jnp.dot(Pt, kxyA, preferred_element_type=f32) * (1.0 / s)  # (C, G)

    # --- k_yy ;  yy[c] = mean over the (S, S) block of atom c  as (C, 1) ---
    d_yy = a_sq_col + a_sq_row - 2.0 * lax.dot_general(
        a, a, _NT, preferred_element_type=f32)                         # (CS,CS)
    k_yy = jnp.exp(d_yy * neg_inv_gamma)
    kyyPt = lax.dot_general(k_yy, Pt, _NT,
                            preferred_element_type=f32)                # (CS, C)
    yy_mat = jnp.dot(Pt, kyyPt, preferred_element_type=f32)            # (C, C)
    yy_col = jnp.sum(yy_mat * eye_c, axis=1,
                     keepdims=True) * (1.0 / (s * s))                  # (C, 1)

    # --- MMD distance (clamped against fp cancellation) + softmax over atoms ---
    mmd = jnp.sqrt(jnp.maximum(yy_col + xx_row - 2.0 * xy_cg, 0.0))    # (C, G)
    y_hat = jnp.exp(-mmd)
    denom = jnp.sum(y_hat, axis=0, keepdims=True)                      # (1, G)
    out_ref[...] = y_hat * pl.reciprocal(denom, approx=True)


def grdl_forward(feat, W, b, atoms, gamma, batch, num_graphs):
    """feat: (N, F_in); atoms: (C, S, D); batch: (N,) int graph ids."""
    C, S, D = atoms.shape
    G = num_graphs
    N = feat.shape[0]

    atoms_flat = atoms.reshape(C * S, D)
    nig = jnp.asarray([-1.0 / gamma], dtype=jnp.float32)
    batch_col = batch.astype(jnp.int32).reshape(N, 1)

    kernel = functools.partial(_grdl_kernel, num_supp=S)
    out_cg = pl.pallas_call(
        kernel,
        out_shape=jax.ShapeDtypeStruct((C, G), jnp.float32),
        in_specs=[
            pl.BlockSpec(memory_space=pltpu.MemorySpace.SMEM),   # -1/gamma
            pl.BlockSpec(memory_space=pltpu.MemorySpace.VMEM),   # batch ids
            pl.BlockSpec(memory_space=pltpu.MemorySpace.VMEM),   # feat
            pl.BlockSpec(memory_space=pltpu.MemorySpace.VMEM),   # W
            pl.BlockSpec(memory_space=pltpu.MemorySpace.VMEM),   # b
            pl.BlockSpec(memory_space=pltpu.MemorySpace.VMEM),   # atoms_flat
        ],
        out_specs=pl.BlockSpec(memory_space=pltpu.MemorySpace.VMEM),
    )(nig, batch_col, feat, W, b, atoms_flat)
    # Single tiny (C, G) -> (G, C) transpose done by XLA outside the kernel.
    return out_cg.T


def grdl_reference(feat, W, b, atoms, gamma, batch, num_graphs):
    """Pure-JAX mirror of the PyTorch forward (cal_mmd + softmax)."""
    x = feat @ W + b
    d_xy = ((atoms[:, :, None, :] - x[None, None, :, :]) ** 2).sum(-1)
    k_xy = jnp.exp(-d_xy / gamma)
    d_yy = ((atoms[:, :, None, :] - atoms[:, None, :, :]) ** 2).sum(-1)
    k_yy = jnp.exp(-d_yy / gamma)
    d_xx = ((x[:, None, :] - x[None, :, :]) ** 2).sum(-1)
    k_xx = jnp.exp(-d_xx / gamma)
    G = num_graphs
    onehot = (batch[:, None] == jnp.arange(G)[None, :]).astype(jnp.float32)
    counts = onehot.sum(axis=0)
    A = onehot / counts[None, :]
    xx = jnp.diag(A.T @ k_xx @ A)
    xy = jnp.mean(k_xy @ A, axis=1)
    yy = k_yy.mean(axis=1).mean(axis=1)
    mmd = jnp.sqrt((yy[:, None] + xx[None, :] - 2.0 * xy).T)
    y_hat = jnp.exp(-mmd)
    return y_hat / y_hat.sum(axis=1, keepdims=True)


if __name__ == "__main__":
    key = jax.random.PRNGKey(0)
    k_feat, k_w, k_b, k_atoms = jax.random.split(key, 4)

    # Small synthetic problem: 3 graphs with 8/10/6 nodes -> N = 24 nodes.
    F_IN = 16            # raw node feature dim
    D = 32               # mmd_in_channels (extractor output dim)
    C = 4                # num_atoms
    S = 8                # num_atom_supp
    GAMMA = 64.0         # gaussian-kernel gamma
    graph_sizes = [8, 10, 6]
    G = len(graph_sizes)
    N = sum(graph_sizes)

    feat = jax.random.normal(k_feat, (N, F_IN), dtype=jnp.float32)
    W = jax.random.normal(k_w, (F_IN, D), dtype=jnp.float32) * 0.1
    b = jax.random.normal(k_b, (1, D), dtype=jnp.float32) * 0.1
    atoms = jax.random.normal(k_atoms, (C, S, D), dtype=jnp.float32)  # ~ normal_(0,1)
    batch = jnp.concatenate(
        [jnp.full((n,), g, dtype=jnp.int32) for g, n in enumerate(graph_sizes)])

    out = grdl_forward(feat, W, b, atoms, GAMMA, batch, G)
    out = jax.block_until_ready(out)

    ref = grdl_reference(feat, W, b, atoms, GAMMA, batch, G)
    assert out.shape == (G, C)
    # Slightly looser than exact-f32 tolerance to accommodate the EUP
    # approx-reciprocal softmax normalization (per perf feedback).
    assert jnp.allclose(out, ref, rtol=2e-3, atol=2e-4), (out, ref)

    print("KERNEL_OK")
</pallas_src>

<mosaic_0001>
module attributes {stable_mosaic.version = 11 : i64} {
  func.func @_grdl_kernel(%arg0: memref<1xf32, #tpu.memory_space<smem>>, %arg1: memref<24x1xi32, #tpu.memory_space<vmem>>, %arg2: memref<24x16xf32, #tpu.memory_space<vmem>>, %arg3: memref<16x32xf32, #tpu.memory_space<vmem>>, %arg4: memref<1x32xf32, #tpu.memory_space<vmem>>, %arg5: memref<32x32xf32, #tpu.memory_space<vmem>>, %arg6: memref<4x3xf32, #tpu.memory_space<vmem>>) attributes {dimension_semantics = [], scalar_prefetch = 0 : i64, scratch_operands = 0 : i64, tpu.core_type = #tpu.core_type<tc>} {
    %c0 = arith.constant 0 : index
    %0 = memref.load %arg0[%c0] : memref<1xf32, #tpu.memory_space<smem>>
    %c0_0 = arith.constant 0 : index
    %c0_1 = arith.constant 0 : index
    %1 = vector.load %arg2[%c0_0, %c0_1] : memref<24x16xf32, #tpu.memory_space<vmem>>, vector<24x16xf32>
    %c0_2 = arith.constant 0 : index
    %c0_3 = arith.constant 0 : index
    %2 = vector.load %arg3[%c0_2, %c0_3] : memref<16x32xf32, #tpu.memory_space<vmem>>, vector<16x32xf32>
    %cst = arith.constant dense<0.000000e+00> : vector<24x32xf32>
    %3 = tpu.matmul %1, %2, %cst {dimension_numbers = #tpu.dot_dimension_numbers<[1], [0], [0], [1], [0, 0, 1, 1], [], []>} : vector<24x16xf32>, vector<16x32xf32>, vector<24x32xf32> -> vector<24x32xf32>
    %c0_4 = arith.constant 0 : index
    %c0_5 = arith.constant 0 : index
    %4 = vector.load %arg4[%c0_4, %c0_5] : memref<1x32xf32, #tpu.memory_space<vmem>>, vector<1x32xf32>
    %5 = vector.broadcast %4 : vector<1x32xf32> to vector<24x32xf32>
    %6 = arith.addf %3, %5 : vector<24x32xf32>
    %c0_6 = arith.constant 0 : index
    %c0_7 = arith.constant 0 : index
    %7 = vector.load %arg5[%c0_6, %c0_7] : memref<32x32xf32, #tpu.memory_space<vmem>>, vector<32x32xf32>
    %8 = tpu.iota {dimensions = array<i32: 1>} : vector<24x3xi32>
    %c0_8 = arith.constant 0 : index
    %c0_9 = arith.constant 0 : index
    %9 = vector.load %arg1[%c0_8, %c0_9] : memref<24x1xi32, #tpu.memory_space<vmem>>, vector<24x1xi32>
    %10 = vector.broadcast %9 : vector<24x1xi32> to vector<24x3xi32>
    %11 = arith.cmpi eq, %10, %8 : vector<24x3xi32>
    %12 = arith.extui %11 : vector<24x3xi1> to vector<24x3xi32>
    %13 = arith.sitofp %12 : vector<24x3xi32> to vector<24x3xf32>
    %cst_10 = arith.constant dense<0.000000e+00> : vector<3xf32>
    %14 = vector.multi_reduction <add>, %13, %cst_10 [0] : vector<24x3xf32> to vector<3xf32>
    %15 = vector.shape_cast %14 : vector<3xf32> to vector<1x3xf32>
    %16 = tpu.reciprocal %15 : vector<1x3xf32> -> vector<1x3xf32>
    %17 = vector.broadcast %16 : vector<1x3xf32> to vector<24x3xf32>
    %18 = arith.mulf %13, %17 : vector<24x3xf32>
    %19 = tpu.iota {dimensions = array<i32: 1>} : vector<4x32xi32>
    %20 = tpu.iota {dimensions = array<i32: 0>} : vector<4x32xi32>
    %c8_i32 = arith.constant 8 : i32
    %21 = vector.broadcast %c8_i32 : i32 to vector<4x32xi32>
    %22 = arith.muli %20, %21 : vector<4x32xi32>
    %23 = arith.cmpi sge, %19, %22 : vector<4x32xi32>
    %c1_i32 = arith.constant 1 : i32
    %24 = vector.broadcast %c1_i32 : i32 to vector<4x32xi32>
    %25 = arith.addi %20, %24 : vector<4x32xi32>
    %c8_i32_11 = arith.constant 8 : i32
    %26 = vector.broadcast %c8_i32_11 : i32 to vector<4x32xi32>
    %27 = arith.muli %25, %26 : vector<4x32xi32>
    %28 = arith.cmpi slt, %19, %27 : vector<4x32xi32>
    %29 = arith.andi %23, %28 : vector<4x32xi1>
    %30 = arith.extui %29 : vector<4x32xi1> to vector<4x32xi32>
    %31 = arith.sitofp %30 : vector<4x32xi32> to vector<4x32xf32>
    %32 = tpu.iota {dimensions = array<i32: 0>} : vector<4x4xi32>
    %33 = tpu.iota {dimensions = array<i32: 1>} : vector<4x4xi32>
    %34 = arith.cmpi eq, %32, %33 : vector<4x4xi32>
    %35 = arith.extui %34 : vector<4x4xi1> to vector<4x4xi32>
    %36 = arith.sitofp %35 : vector<4x4xi32> to vector<4x4xf32>
    %cst_12 = arith.constant 1.000000e+00 : f32
    %37 = vector.broadcast %cst_12 : f32 to vector<32x1xf32>
    %cst_13 = arith.constant 1.000000e+00 : f32
    %38 = vector.broadcast %cst_13 : f32 to vector<1x32xf32>
    %39 = arith.mulf %6, %6 : vector<24x32xf32>
    %40 = arith.mulf %7, %7 : vector<32x32xf32>
    %cst_14 = arith.constant dense<0.000000e+00> : vector<24x1xf32>
    %41 = tpu.matmul %39, %37, %cst_14 {dimension_numbers = #tpu.dot_dimension_numbers<[1], [0], [0], [1], [0, 0, 1, 1], [], []>} : vector<24x32xf32>, vector<32x1xf32>, vector<24x1xf32> -> vector<24x1xf32>
    %cst_15 = arith.constant dense<0.000000e+00> : vector<1x24xf32>
    %42 = tpu.matmul %38, %39, %cst_15 {dimension_numbers = #tpu.dot_dimension_numbers<[1], [1], [0], [0], [0, 0, 1, 0], [], []>} : vector<1x32xf32>, vector<24x32xf32>, vector<1x24xf32> -> vector<1x24xf32>
    %cst_16 = arith.constant dense<0.000000e+00> : vector<32x1xf32>
    %43 = tpu.matmul %40, %37, %cst_16 {dimension_numbers = #tpu.dot_dimension_numbers<[1], [0], [0], [1], [0, 0, 1, 1], [], []>} : vector<32x32xf32>, vector<32x1xf32>, vector<32x1xf32> -> vector<32x1xf32>
    %cst_17 = arith.constant dense<0.000000e+00> : vector<1x32xf32>
    %44 = tpu.matmul %38, %40, %cst_17 {dimension_numbers = #tpu.dot_dimension_numbers<[1], [1], [0], [0], [0, 0, 1, 0], [], []>} : vector<1x32xf32>, vector<32x32xf32>, vector<1x32xf32> -> vector<1x32xf32>
    %45 = vector.broadcast %41 : vector<24x1xf32> to vector<24x24xf32>
    %46 = vector.broadcast %42 : vector<1x24xf32> to vector<24x24xf32>
    %47 = arith.addf %45, %46 : vector<24x24xf32>
    %cst_18 = arith.constant dense<0.000000e+00> : vector<24x24xf32>
    %48 = tpu.matmul %6, %6, %cst_18 {dimension_numbers = #tpu.dot_dimension_numbers<[1], [1], [0], [0], [0, 0, 1, 0], [], []>} : vector<24x32xf32>, vector<24x32xf32>, vector<24x24xf32> -> vector<24x24xf32>
    %cst_19 = arith.constant 2.000000e+00 : f32
    %49 = vector.broadcast %cst_19 : f32 to vector<24x24xf32>
    %50 = arith.mulf %49, %48 : vector<24x24xf32>
    %51 = arith.subf %47, %50 : vector<24x24xf32>
    %52 = vector.broadcast %0 : f32 to vector<24x24xf32>
    %53 = arith.mulf %51, %52 : vector<24x24xf32>
    %54 = math.exp %53 : vector<24x24xf32>
    %cst_20 = arith.constant dense<0.000000e+00> : vector<24x3xf32>
    %55 = tpu.matmul %54, %18, %cst_20 {dimension_numbers = #tpu.dot_dimension_numbers<[1], [0], [0], [1], [0, 0, 1, 1], [], []>} : vector<24x24xf32>, vector<24x3xf32>, vector<24x3xf32> -> vector<24x3xf32>
    %56 = arith.mulf %18, %55 : vector<24x3xf32>
    %cst_21 = arith.constant dense<0.000000e+00> : vector<3xf32>
    %57 = vector.multi_reduction <add>, %56, %cst_21 [0] : vector<24x3xf32> to vector<3xf32>
    %58 = vector.shape_cast %57 : vector<3xf32> to vector<1x3xf32>
    %59 = vector.broadcast %43 : vector<32x1xf32> to vector<32x24xf32>
    %60 = vector.broadcast %42 : vector<1x24xf32> to vector<32x24xf32>
    %61 = arith.addf %59, %60 : vector<32x24xf32>
    %cst_22 = arith.constant dense<0.000000e+00> : vector<32x24xf32>
    %62 = tpu.matmul %7, %6, %cst_22 {dimension_numbers = #tpu.dot_dimension_numbers<[1], [1], [0], [0], [0, 0, 1, 0], [], []>} : vector<32x32xf32>, vector<24x32xf32>, vector<32x24xf32> -> vector<32x24xf32>
    %cst_23 = arith.constant 2.000000e+00 : f32
    %63 = vector.broadcast %cst_23 : f32 to vector<32x24xf32>
    %64 = arith.mulf %63, %62 : vector<32x24xf32>
    %65 = arith.subf %61, %64 : vector<32x24xf32>
    %66 = vector.broadcast %0 : f32 to vector<32x24xf32>
    %67 = arith.mulf %65, %66 : vector<32x24xf32>
    %68 = math.exp %67 : vector<32x24xf32>
    %cst_24 = arith.constant dense<0.000000e+00> : vector<32x3xf32>
    %69 = tpu.matmul %68, %18, %cst_24 {dimension_numbers = #tpu.dot_dimension_numbers<[1], [0], [0], [1], [0, 0, 1, 1], [], []>} : vector<32x24xf32>, vector<24x3xf32>, vector<32x3xf32> -> vector<32x3xf32>
    %cst_25 = arith.constant dense<0.000000e+00> : vector<4x3xf32>
    %70 = tpu.matmul %31, %69, %cst_25 {dimension_numbers = #tpu.dot_dimension_numbers<[1], [0], [0], [1], [0, 0, 1, 1], [], []>} : vector<4x32xf32>, vector<32x3xf32>, vector<4x3xf32> -> vector<4x3xf32>
    %cst_26 = arith.constant 1.250000e-01 : f32
    %71 = vector.broadcast %cst_26 : f32 to vector<4x3xf32>
    %72 = arith.mulf %70, %71 : vector<4x3xf32>
    %73 = vector.broadcast %43 : vector<32x1xf32> to vector<32x32xf32>
    %74 = vector.broadcast %44 : vector<1x32xf32> to vector<32x32xf32>
    %75 = arith.addf %73, %74 : vector<32x32xf32>
    %cst_27 = arith.constant dense<0.000000e+00> : vector<32x32xf32>
    %76 = tpu.matmul %7, %7, %cst_27 {dimension_numbers = #tpu.dot_dimension_numbers<[1], [1], [0], [0], [0, 0, 1, 0], [], []>} : vector<32x32xf32>, vector<32x32xf32>, vector<32x32xf32> -> vector<32x32xf32>
    %cst_28 = arith.constant 2.000000e+00 : f32
    %77 = vector.broadcast %cst_28 : f32 to vector<32x32xf32>
    %78 = arith.mulf %77, %76 : vector<32x32xf32>
    %79 = arith.subf %75, %78 : vector<32x32xf32>
    %80 = vector.broadcast %0 : f32 to vector<32x32xf32>
    %81 = arith.mulf %79, %80 : vector<32x32xf32>
    %82 = math.exp %81 : vector<32x32xf32>
    %cst_29 = arith.constant dense<0.000000e+00> : vector<32x4xf32>
    %83 = tpu.matmul %82, %31, %cst_29 {dimension_numbers = #tpu.dot_dimension_numbers<[1], [1], [0], [0], [0, 0, 1, 0], [], []>} : vector<32x32xf32>, vector<4x32xf32>, vector<32x4xf32> -> vector<32x4xf32>
    %cst_30 = arith.constant dense<0.000000e+00> : vector<4x4xf32>
    %84 = tpu.matmul %31, %83, %cst_30 {dimension_numbers = #tpu.dot_dimension_numbers<[1], [0], [0], [1], [0, 0, 1, 1], [], []>} : vector<4x32xf32>, vector<32x4xf32>, vector<4x4xf32> -> vector<4x4xf32>
    %85 = arith.mulf %84, %36 : vector<4x4xf32>
    %cst_31 = arith.constant dense<0.000000e+00> : vector<4xf32>
    %86 = vector.multi_reduction <add>, %85, %cst_31 [1] : vector<4x4xf32> to vector<4xf32>
    %87 = vector.shape_cast %86 : vector<4xf32> to vector<4x1xf32>
    %cst_32 = arith.constant 1.562500e-02 : f32
    %88 = vector.broadcast %cst_32 : f32 to vector<4x1xf32>
    %89 = arith.mulf %87, %88 : vector<4x1xf32>
    %90 = vector.broadcast %89 : vector<4x1xf32> to vector<4x3xf32>
    %91 = vector.broadcast %58 : vector<1x3xf32> to vector<4x3xf32>
    %92 = arith.addf %90, %91 : vector<4x3xf32>
    %cst_33 = arith.constant 2.000000e+00 : f32
    %93 = vector.broadcast %cst_33 : f32 to vector<4x3xf32>
    %94 = arith.mulf %93, %72 : vector<4x3xf32>
    %95 = arith.subf %92, %94 : vector<4x3xf32>
    %cst_34 = arith.constant 0.000000e+00 : f32
    %96 = vector.broadcast %cst_34 : f32 to vector<4x3xf32>
    %97 = arith.maximumf %95, %96 : vector<4x3xf32>
    %98 = math.sqrt %97 : vector<4x3xf32>
    %cst_35 = arith.constant 0.000000e+00 : f32
    %99 = vector.broadcast %cst_35 : f32 to vector<4x3xf32>
    %100 = arith.subf %99, %98 : vector<4x3xf32>
    %101 = math.exp %100 : vector<4x3xf32>
    %cst_36 = arith.constant dense<0.000000e+00> : vector<3xf32>
    %102 = vector.multi_reduction <add>, %101, %cst_36 [0] : vector<4x3xf32> to vector<3xf32>
    %103 = vector.shape_cast %102 : vector<3xf32> to vector<1x3xf32>
    %104 = tpu.reciprocal %103 {approx = true} : vector<1x3xf32> -> vector<1x3xf32>
    %105 = vector.broadcast %104 : vector<1x3xf32> to vector<4x3xf32>
    %106 = arith.mulf %101, %105 : vector<4x3xf32>
    %c0_37 = arith.constant 0 : index
    %c0_38 = arith.constant 0 : index
    %107 = vector.load %arg6[%c0_37, %c0_38] : memref<4x3xf32, #tpu.memory_space<vmem>>, vector<4x3xf32>
    tpu.vector_store %arg6[%c0_37, %c0_38], %106 {strides = array<i32>} : memref<4x3xf32, #tpu.memory_space<vmem>>, vector<4x3xf32>,
    return
  }
}

</mosaic_0001>

<llo_original>
// kernel: tpu_custom_call.1
$region0: #{tpu_custom_call.1}
  #allocation0 [shape = 'u32[]', space=smem, size = 0x4, offset = 0x4, fixed_abs, tag = 'smem constant byte address 0x4 - core index']
  #allocation1 [shape = 'u32[144,128]{1,0:T(1,128)}', space=vmem, size = 0x12000, scoped, tag = 'internal scratch']
  #allocation2 [shape = 'f32[1]{0:T(128)S(6)}', space=smem, size = 0x200, scoped, tag = 'scoped memory for tpu_custom_call.1']
  %s0 = inlined_call_operand.<no memory space> [shape: f32[1], index: 0, kind: input, shape index: {}]
  %s1 = inlined_call_operand.vmem [shape: s32[24,1], index: 1, kind: input, shape index: {}]
  %s2 = inlined_call_operand.vmem [shape: f32[24,16], index: 2, kind: input, shape index: {}]
  %s3 = inlined_call_operand.vmem [shape: f32[16,32], index: 3, kind: input, shape index: {}]
  %s4 = inlined_call_operand.vmem [shape: f32[1,32], index: 4, kind: input, shape index: {}]
  %s5 = inlined_call_operand.vmem [shape: f32[32,32], index: 5, kind: input, shape index: {}]
  %s6 = inlined_call_operand.hbm [shape: f32[4,3], index: 6, kind: output, shape index: {}]
  %s7 = sld [smem:[#allocation0]]
  $region34: #{tpu_custom_call.1} parent=0
    _
  %s9 = ssub.s32 1, %s7
  %s10 = scalar_select 0, %s9, %s7
  %11 = sst [smem:[#allocation2]] %s0
  $region1: #{tpu_custom_call.1} parent=0
    #allocation3 [shape = 'u8[2048]{0}', space=vmem, size = 0x800, scoped, tag = 'output window, operand 0, single buffered']
    #allocation4 [shape = 's32[1]{0}', space=sflag, size = 0x4, scoped, tag = 'scoped memory for tpu_custom_call.1']
    %12 = vsyncpa [#allocation4], 0
    // Predicated region
    $region2: #{tpu_custom_call.1} parent=1 // pred_check
      _
    $region3: #{tpu_custom_call.1} parent=1 // pred_check_branch
      %14 = sbr.rel (0) target = $region5
    $region4: #{tpu_custom_call.1} parent=1 // pred_region
      _
    $region5: #{tpu_custom_call.1} parent=1 // pred_fallthru
      _
    // Predicated region
    $region6: #{tpu_custom_call.1} parent=1 // pred_check
      _
    $region7: #{tpu_custom_call.1} parent=1 // pred_check_branch
      %16 = sbr.rel (0) target = $region9
    $region8: #{tpu_custom_call.1} parent=1 // pred_region
      _
    $region9: #{tpu_custom_call.1} parent=1 // pred_fallthru
      _
    // Predicated region
    $region10: #{tpu_custom_call.1} parent=1 // pred_check
      _
    $region11: #{tpu_custom_call.1} parent=1 // pred_check_branch
      %18 = sbr.rel (0) target = $region13
    $region12: #{tpu_custom_call.1} parent=1 // pred_region
      _
    $region13: #{tpu_custom_call.1} parent=1 // pred_fallthru
      _
    // Predicated region
    $region14: #{tpu_custom_call.1} parent=1 // pred_check
      _
    $region15: #{tpu_custom_call.1} parent=1 // pred_check_branch
      %20 = sbr.rel (0) target = $region17
    $region16: #{tpu_custom_call.1} parent=1 // pred_region
      _
    $region17: #{tpu_custom_call.1} parent=1 // pred_fallthru
      _
    // Predicated region
    $region18: #{tpu_custom_call.1} parent=1 // pred_check
      _
    $region19: #{tpu_custom_call.1} parent=1 // pred_check_branch
      %22 = sbr.rel (0) target = $region21
    $region20: #{tpu_custom_call.1} parent=1 // pred_region
      _
    $region21: #{tpu_custom_call.1} parent=1 // pred_fallthru
      _
    // Predicated region
    $region22: #{tpu_custom_call.1} parent=1 // pred_check
      _
    $region23: #{tpu_custom_call.1} parent=1 // pred_check_branch
      %24 = sbr.rel (0) target = $region25
    $region24: #{tpu_custom_call.1} parent=1 // pred_region
      _
    $region25: #{tpu_custom_call.1} parent=1 // pred_fallthru
      _
    %s25 = sld [smem:[#allocation2]]
    %v26 = vld [vmem:[%s2] sm:$0xff]
    %v27 = vld [vmem:[%s2 + $0x8] sm:$0xff]
    %v28 = vld [vmem:[%s2 + $0x10] sm:$0xff]
    %v29 = vld [vmem:[%s3] sm:$0xff]
    %v30 = vld [vmem:[%s3 + $0x8] sm:$0xff]
    %v31 = vld [vmem:[%s4] sm:$0x1]
    %v33 = vlaneseq
    %v34 = vshrl.u32 %v33, 7
    %v35 = vsub.s32 0, %v34
    %v36 = vrot.slane %v31, %v35
    %vm38 = vcmask 130048
    %v40 = vsel %vm38, %v26, 0
    %v43 = vsel %vm38, %v27, 0
    %v46 = vsel %vm38, %v28, 0
    %48 = vmatprep.subr.mxu0 0.0
    %49 = vmatpush1.msra.mxu0 0.0
    %50 = vmatprep.subr.mxu0 0.0
    %51 = vmatpush1.msra.mxu0 0.0
    %52 = vmatprep.subr.mxu0 0.0
    %53 = vmatpush1.msra.mxu0 0.0
    %54 = vmatprep.subr.mxu0 0.0
    %55 = vmatpush1.msra.mxu0 0.0
    %56 = vmatprep.subr.mxu0 0.0
    %57 = vmatpush1.msra.mxu0 0.0
    %58 = vmatprep.subr.mxu0 0.0
    %59 = vmatpush1.msra.mxu0 0.0
    %60 = vmatprep.subr.mxu0 0.0
    %61 = vmatpush1.msra.mxu0 0.0
    %62 = vmatprep.subr.mxu0 0.0
    %63 = vmatpush1.msra.mxu0 0.0
    %64 = vmatprep.subr.mxu0 0.0
    %65 = vmatpush1.msra.mxu0 0.0
    %66 = vmatprep.subr.mxu0 0.0
    %67 = vmatpush1.msra.mxu0 0.0
    %68 = vmatprep.subr.mxu0 0.0
    %69 = vmatpush1.msra.mxu0 0.0
    %70 = vmatprep.subr.mxu0 0.0
    %71 = vmatpush1.msra.mxu0 0.0
    %72 = vmatprep.subr.mxu0 0.0
    %73 = vmatpush1.msra.mxu0 0.0
    %74 = vmatprep.subr.mxu0 0.0
    %75 = vmatpush1.msra.mxu0 0.0
    %76 = vmatprep.subr.mxu0 0.0
    %77 = vmatpush1.msra.mxu0 %v30
    %78 = vmatprep.subr.mxu0 0.0
    %79 = vmatpush1.msra.mxu0 %v29
    %80 = vmatprep.subr.mxu0 0.0
    %81 = vmatpush2.msra.mxu0 0.0
    %82 = vmatprep.subr.mxu0 0.0
    %83 = vmatpush2.msra.mxu0 0.0
    %84 = vmatprep.subr.mxu0 0.0
    %85 = vmatpush2.msra.mxu0 0.0
    %86 = vmatprep.subr.mxu0 0.0
    %87 = vmatpush2.msra.mxu0 0.0
    %88 = vmatprep.subr.mxu0 0.0
    %89 = vmatpush2.msra.mxu0 0.0
    %90 = vmatprep.subr.mxu0 0.0
    %91 = vmatpush2.msra.mxu0 0.0
    %92 = vmatprep.subr.mxu0 0.0
    %93 = vmatpush2.msra.mxu0 0.0
    %94 = vmatprep.subr.mxu0 0.0
    %95 = vmatpush2.msra.mxu0 0.0
    %96 = vmatprep.subr.mxu0 0.0
    %97 = vmatpush2.msra.mxu0 0.0
    %98 = vmatprep.subr.mxu0 0.0
    %99 = vmatpush2.msra.mxu0 0.0
    %100 = vmatprep.subr.mxu0 0.0
    %101 = vmatpush2.msra.mxu0 0.0
    %102 = vmatprep.subr.mxu0 0.0
    %103 = vmatpush2.msra.mxu0 0.0
    %104 = vmatprep.subr.mxu0 0.0
    %105 = vmatpush2.msra.mxu0 0.0
    %106 = vmatprep.subr.mxu0 0.0
    %107 = vmatpush2.msra.mxu0 0.0
    %108 = vmatprep.subr.mxu0 0.0
    %109 = vmatpush2.msra.mxu0 0.0
    %110 = vmatprep.subr.mxu0 0.0
    %111 = vmatpush2.msra.mxu0 0.0
    %112 = vmatprep.mubr.f32.mxu0 0.0
    %113 = vmatmul.mubr.f32.gmra.mxu0 %v40
    %v114 = vpop.f32.mrf.mxu0
    %v115 = vadd.f32 %v36, %v114
    %v116 = vpop.f32.mrf.mxu0
    %117 = vmatprep.mubr.f32.mxu0 0.0
    %118 = vmatmul.mubr.f32.gmra.mxu0 %v43
    %v119 = vpop.f32.mrf.mxu0
    %v120 = vadd.f32 %v36, %v119
    %v121 = vpop.f32.mrf.mxu0
    %122 = vmatprep.mubr.f32.mxu0 0.0
    %123 = vmatmul.mubr.f32.gmra.mxu0 %v46
    %v124 = vpop.f32.mrf.mxu0
    %v125 = vadd.f32 %v36, %v124
    %v126 = vpop.f32.mrf.mxu0
    %127 = vdwg.mxu0
    %v128 = vld [vmem:[%s5] sm:$0xff]
    %v129 = vld [vmem:[%s5 + $0x8] sm:$0xff]
    %v130 = vld [vmem:[%s5 + $0x10] sm:$0xff]
    %v131 = vld [vmem:[%s5 + $0x18] sm:$0xff]
    %v132 = vlaneseq
    %v133 = vand.u32 %v132, 127
    %v134 = vld [vmem:[%s1] sm:$0xff]
    %v135 = vld [vmem:[%s1 + $0x8] sm:$0xff]
    %v136 = vld [vmem:[%s1 + $0x10] sm:$0xff]
    %137 = vset.pattern.permute.xlu0 0
    %138 = vperm.xlu0 %137, %v134
    %v139 = vpop.permute.xlu0 %138
    %140 = vset.pattern.permute.xlu0 0
    %141 = vperm.xlu0 %140, %v135
    %v142 = vpop.permute.xlu0 %141
    %143 = vset.pattern.permute.xlu0 0
    %144 = vperm.xlu0 %143, %v136
    %v145 = vpop.permute.xlu0 %144
    %vm146 = vcmp.eq.s32.totalorder %v139, %v133
    %vm147 = vcmp.eq.s32.totalorder %v142, %v133
    %vm148 = vcmp.eq.s32.totalorder %v145, %v133
    %v149 = vsel %vm146, 1, 0
    %v150 = vsel %vm147, 1, 0
    %v151 = vsel %vm148, 1, 0
    %v152 = vcvt.s32.f32 %v149
    %v153 = vcvt.s32.f32 %v150
    %v154 = vcvt.s32.f32 %v151
    %vm155 = vcmask 23552
    %v156 = vsel %vm155, %v152, 0.0
    %v157 = vsel %vm155, %v153, 0.0
    %v158 = vadd.f32 %v156, %v157
    %v159 = vsel %vm155, %v154, 0.0
    %v160 = vadd.f32 %v158, %v159
    %v161 = vrot.slane %v160, 4
    %v162 = vadd.f32 %v160, %v161
    %v163 = vrot.slane %v162, 2
    %v164 = vadd.f32 %v162, %v163
    %v165 = vrot.slane %v164, 1
    %v166 = vadd.f32 %v164, %v165
    %v167 = vrcp.pop %v166
    %v168 = vmul.f32 %v152, %v167
    %v169 = vmul.f32 %v153, %v167
    %v170 = vmul.f32 %v154, %v167
    %v171 = vlaneseq
    %v172 = vshrl.u32 %v171, 7
    %v173 = vmul.u32 %v172, 8
    %vm174 = vcmp.ge.s32.totalorder %v133, %v173
    %v175 = vadd.s32 %v172, 1
    %v176 = vmul.u32 %v175, 8
    %vm177 = vcmp.lt.s32.totalorder %v133, %v176
    %vm178 = vmand %vm174, %vm177
    %v179 = vsel %vm178, 1, 0
    %v180 = vcvt.s32.f32 %v179
    %vm181 = vcmp.eq.s32.totalorder %v172, %v133
    %v182 = vsel %vm181, 1, 0
    %v183 = vcvt.s32.f32 %v182
    %v184 = vmul.f32 %v115, %v115
    %v185 = vmul.f32 %v120, %v120
    %v186 = vmul.f32 %v125, %v125
    %v187 = vmul.f32 %v128, %v128
    %v188 = vmul.f32 %v129, %v129
    %v189 = vmul.f32 %v130, %v130
    %v190 = vmul.f32 %v131, %v131
    %vm191 = vcmask 261120
    %v193 = vsel %vm191, %v184, 0
    %v196 = vsel %vm191, %v185, 0
    %v199 = vsel %vm191, %v186, 0
    %201 = vmatprep.subr.mxu0 0.0
    %202 = vmatpush1.msra.mxu0 0.0
    %203 = vmatprep.subr.mxu0 0.0
    %204 = vmatpush1.msra.mxu0 0.0
    %205 = vmatprep.subr.mxu0 0.0
    %206 = vmatpush1.msra.mxu0 0.0
    %207 = vmatprep.subr.mxu0 0.0
    %208 = vmatpush1.msra.mxu0 0.0
    %209 = vmatprep.subr.mxu0 0.0
    %210 = vmatpush1.msra.mxu0 0.0
    %211 = vmatprep.subr.mxu0 0.0
    %212 = vmatpush1.msra.mxu0 0.0
    %213 = vmatprep.subr.mxu0 0.0
    %214 = vmatpush1.msra.mxu0 0.0
    %215 = vmatprep.subr.mxu0 0.0
    %216 = vmatpush1.msra.mxu0 0.0
    %217 = vmatprep.subr.mxu0 0.0
    %218 = vmatpush1.msra.mxu0 0.0
    %219 = vmatprep.subr.mxu0 0.0
    %220 = vmatpush1.msra.mxu0 0.0
    %221 = vmatprep.subr.mxu0 0.0
    %222 = vmatpush1.msra.mxu0 0.0
    %223 = vmatprep.subr.mxu0 0.0
    %224 = vmatpush1.msra.mxu0 0.0
    %225 = vmatprep.subr.mxu0 0.0
    %226 = vmatpush1.msra.mxu0 1.0
    %227 = vmatprep.subr.mxu0 0.0
    %228 = vmatpush1.msra.mxu0 1.0
    %229 = vmatprep.subr.mxu0 0.0
    %230 = vmatpush1.msra.mxu0 1.0
    %231 = vmatprep.subr.mxu0 0.0
    %232 = vmatpush1.msra.mxu0 1.0
    %233 = vmatprep.subr.mxu0 0.0
    %234 = vmatpush2.msra.mxu0 0.0
    %235 = vmatprep.subr.mxu0 0.0
    %236 = vmatpush2.msra.mxu0 0.0
    %237 = vmatprep.subr.mxu0 0.0
    %238 = vmatpush2.msra.mxu0 0.0
    %239 = vmatprep.subr.mxu0 0.0
    %240 = vmatpush2.msra.mxu0 0.0
    %241 = vmatprep.subr.mxu0 0.0
    %242 = vmatpush2.msra.mxu0 0.0
    %243 = vmatprep.subr.mxu0 0.0
    %244 = vmatpush2.msra.mxu0 0.0
    %245 = vmatprep.subr.mxu0 0.0
    %246 = vmatpush2.msra.mxu0 0.0
    %247 = vmatprep.subr.mxu0 0.0
    %248 = vmatpush2.msra.mxu0 0.0
    %249 = vmatprep.subr.mxu0 0.0
    %250 = vmatpush2.msra.mxu0 0.0
    %251 = vmatprep.subr.mxu0 0.0
    %252 = vmatpush2.msra.mxu0 0.0
    %253 = vmatprep.subr.mxu0 0.0
    %254 = vmatpush2.msra.mxu0 0.0
    %255 = vmatprep.subr.mxu0 0.0
    %256 = vmatpush2.msra.mxu0 0.0
    %257 = vmatprep.subr.mxu0 0.0
    %258 = vmatpush2.msra.mxu0 0.0
    %259 = vmatprep.subr.mxu0 0.0
    %260 = vmatpush2.msra.mxu0 0.0
    %261 = vmatprep.subr.mxu0 0.0
    %262 = vmatpush2.msra.mxu0 0.0
    %263 = vmatprep.subr.mxu0 0.0
    %264 = vmatpush2.msra.mxu0 0.0
    %265 = vmatprep.mubr.f32.mxu0 0.0
    %266 = vmatmul.mubr.f32.gmra.mxu0 %v193
    %v267 = vpop.f32.mrf.mxu0
    %v268 = vadd.f32 0.0, %v267
    %v269 = vpop.f32.mrf.mxu0
    %270 = vmatprep.mubr.f32.mxu0 0.0
    %271 = vmatmul.mubr.f32.gmra.mxu0 %v196
    %v272 = vpop.f32.mrf.mxu0
    %v273 = vadd.f32 0.0, %v272
    %v274 = vpop.f32.mrf.mxu0
    %275 = vmatprep.mubr.f32.mxu0 0.0
    %276 = vmatmul.mubr.f32.gmra.mxu0 %v199
    %v277 = vpop.f32.mrf.mxu0
    %v278 = vadd.f32 0.0, %v277
    %v279 = vpop.f32.mrf.mxu0
    %280 = vdwg.mxu0
    %v282 = vsel %vm191, 1.0, 0
    %284 = vmatprep.subr.mxu0 0.0
    %285 = vmatpush1.xpose.msra.mxu0 0.0
    %286 = vmatprep.subr.mxu0 0.0
    %287 = vmatpush1.xpose.msra.mxu0 0.0
    %288 = vmatprep.subr.mxu0 0.0
    %289 = vmatpush1.xpose.msra.mxu0 0.0
    %290 = vmatprep.subr.mxu0 0.0
    %291 = vmatpush1.xpose.msra.mxu0 0.0
    %292 = vmatprep.subr.mxu0 0.0
    %293 = vmatpush1.xpose.msra.mxu0 0.0
    %294 = vmatprep.subr.mxu0 0.0
    %295 = vmatpush1.xpose.msra.mxu0 0.0
    %296 = vmatprep.subr.mxu0 0.0
    %297 = vmatpush1.xpose.msra.mxu0 0.0
    %298 = vmatprep.subr.mxu0 0.0
    %299 = vmatpush1.xpose.msra.mxu0 0.0
    %300 = vmatprep.subr.mxu0 0.0
    %301 = vmatpush1.xpose.msra.mxu0 0.0
    %302 = vmatprep.subr.mxu0 0.0
    %303 = vmatpush1.xpose.msra.mxu0 0.0
    %304 = vmatprep.subr.mxu0 0.0
    %305 = vmatpush1.xpose.msra.mxu0 0.0
    %306 = vmatprep.subr.mxu0 0.0
    %307 = vmatpush1.xpose.msra.mxu0 0.0
    %308 = vmatprep.subr.mxu0 0.0
    %309 = vmatpush1.xpose.msra.mxu0 0.0
    %310 = vmatprep.subr.mxu0 0.0
    %311 = vmatpush1.xpose.msra.mxu0 %v199
    %312 = vmatprep.subr.mxu0 0.0
    %313 = vmatpush1.xpose.msra.mxu0 %v196
    %314 = vmatprep.subr.mxu0 0.0
    %315 = vmatpush1.xpose.msra.mxu0 %v193
    %316 = vmatprep.subr.mxu0 0.0
    %317 = vmatpush2.xpose.msra.mxu0 0.0
    %318 = vmatprep.subr.mxu0 0.0
    %319 = vmatpush2.xpose.msra.mxu0 0.0
    %320 = vmatprep.subr.mxu0 0.0
    %321 = vmatpush2.xpose.msra.mxu0 0.0
    %322 = vmatprep.subr.mxu0 0.0
    %323 = vmatpush2.xpose.msra.mxu0 0.0
    %324 = vmatprep.subr.mxu0 0.0
    %325 = vmatpush2.xpose.msra.mxu0 0.0
    %326 = vmatprep.subr.mxu0 0.0
    %327 = vmatpush2.xpose.msra.mxu0 0.0
    %328 = vmatprep.subr.mxu0 0.0
    %329 = vmatpush2.xpose.msra.mxu0 0.0
    %330 = vmatprep.subr.mxu0 0.0
    %331 = vmatpush2.xpose.msra.mxu0 0.0
    %332 = vmatprep.subr.mxu0 0.0
    %333 = vmatpush2.xpose.msra.mxu0 0.0
    %334 = vmatprep.subr.mxu0 0.0
    %335 = vmatpush2.xpose.msra.mxu0 0.0
    %336 = vmatprep.subr.mxu0 0.0
    %337 = vmatpush2.xpose.msra.mxu0 0.0
    %338 = vmatprep.subr.mxu0 0.0
    %339 = vmatpush2.xpose.msra.mxu0 0.0
    %340 = vmatprep.subr.mxu0 0.0
    %341 = vmatpush2.xpose.msra.mxu0 0.0
    %342 = vmatprep.subr.mxu0 0.0
    %343 = vmatpush2.xpose.msra.mxu0 0.0
    %344 = vmatprep.subr.mxu0 0.0
    %345 = vmatpush2.xpose.msra.mxu0 0.0
    %346 = vmatprep.subr.mxu0 0.0
    %347 = vmatpush2.xpose.msra.mxu0 0.0
    %348 = vmatprep.mubr.f32.mxu0 0.0
    %349 = vmatmul.mubr.f32.gmra.mxu0 %v282
    %v350 = vpop.f32.mrf.mxu0
    %v351 = vadd.f32 0.0, %v350
    %v352 = vpop.f32.mrf.mxu0
    %353 = vdwg.mxu0
    %v355 = vsel %vm191, %v187, 0
    %v358 = vsel %vm191, %v188, 0
    %v361 = vsel %vm191, %v189, 0
    %v364 = vsel %vm191, %v190, 0
    %366 = vmatprep.subr.mxu0 0.0
    %367 = vmatpush1.msra.mxu0 0.0
    %368 = vmatprep.subr.mxu0 0.0
    %369 = vmatpush1.msra.mxu0 0.0
    %370 = vmatprep.subr.mxu0 0.0
    %371 = vmatpush1.msra.mxu0 0.0
    %372 = vmatprep.subr.mxu0 0.0
    %373 = vmatpush1.msra.mxu0 0.0
    %374 = vmatprep.subr.mxu0 0.0
    %375 = vmatpush1.msra.mxu0 0.0
    %376 = vmatprep.subr.mxu0 0.0
    %377 = vmatpush1.msra.mxu0 0.0
    %378 = vmatprep.subr.mxu0 0.0
    %379 = vmatpush1.msra.mxu0 0.0
    %380 = vmatprep.subr.mxu0 0.0
    %381 = vmatpush1.msra.mxu0 0.0
    %382 = vmatprep.subr.mxu0 0.0
    %383 = vmatpush1.msra.mxu0 0.0
    %384 = vmatprep.subr.mxu0 0.0
    %385 = vmatpush1.msra.mxu0 0.0
    %386 = vmatprep.subr.mxu0 0.0
    %387 = vmatpush1.msra.mxu0 0.0
    %388 = vmatprep.subr.mxu0 0.0
    %389 = vmatpush1.msra.mxu0 0.0
    %390 = vmatprep.subr.mxu0 0.0
    %391 = vmatpush1.msra.mxu0 1.0
    %392 = vmatprep.subr.mxu0 0.0
    %393 = vmatpush1.msra.mxu0 1.0
    %394 = vmatprep.subr.mxu0 0.0
    %395 = vmatpush1.msra.mxu0 1.0
    %396 = vmatprep.subr.mxu0 0.0
    %397 = vmatpush1.msra.mxu0 1.0
    %398 = vmatprep.subr.mxu0 0.0
    %399 = vmatpush2.msra.mxu0 0.0
    %400 = vmatprep.subr.mxu0 0.0
    %401 = vmatpush2.msra.mxu0 0.0
    %402 = vmatprep.subr.mxu0 0.0
    %403 = vmatpush2.msra.mxu0 0.0
    %404 = vmatprep.subr.mxu0 0.0
    %405 = vmatpush2.msra.mxu0 0.0
    %406 = vmatprep.subr.mxu0 0.0
    %407 = vmatpush2.msra.mxu0 0.0
    %408 = vmatprep.subr.mxu0 0.0
    %409 = vmatpush2.msra.mxu0 0.0
    %410 = vmatprep.subr.mxu0 0.0
    %411 = vmatpush2.msra.mxu0 0.0
    %412 = vmatprep.subr.mxu0 0.0
    %413 = vmatpush2.msra.mxu0 0.0
    %414 = vmatprep.subr.mxu0 0.0
    %415 = vmatpush2.msra.mxu0 0.0
    %416 = vmatprep.subr.mxu0 0.0
    %417 = vmatpush2.msra.mxu0 0.0
    %418 = vmatprep.subr.mxu0 0.0
    %419 = vmatpush2.msra.mxu0 0.0
    %420 = vmatprep.subr.mxu0 0.0
    %421 = vmatpush2.msra.mxu0 0.0
    %422 = vmatprep.subr.mxu0 0.0
    %423 = vmatpush2.msra.mxu0 0.0
    %424 = vmatprep.subr.mxu0 0.0
    %425 = vmatpush2.msra.mxu0 0.0
    %426 = vmatprep.subr.mxu0 0.0
    %427 = vmatpush2.msra.mxu0 0.0
    %428 = vmatprep.subr.mxu0 0.0
    %429 = vmatpush2.msra.mxu0 0.0
    %430 = vmatprep.mubr.f32.mxu0 0.0
    %431 = vmatmul.mubr.f32.gmra.mxu0 %v355
    %v432 = vpop.f32.mrf.mxu0
    %v433 = vadd.f32 0.0, %v432
    %v434 = vpop.f32.mrf.mxu0
    %435 = vmatprep.mubr.f32.mxu0 0.0
    %436 = vmatmul.mubr.f32.gmra.mxu0 %v358
    %v437 = vpop.f32.mrf.mxu0
    %v438 = vadd.f32 0.0, %v437
    %v439 = vpop.f32.mrf.mxu0
    %440 = vmatprep.mubr.f32.mxu0 0.0
    %441 = vmatmul.mubr.f32.gmra.mxu0 %v361
    %v442 = vpop.f32.mrf.mxu0
    %v443 = vadd.f32 0.0, %v442
    %v444 = vpop.f32.mrf.mxu0
    %445 = vmatprep.mubr.f32.mxu0 0.0
    %446 = vmatmul.mubr.f32.gmra.mxu0 %v364
    %v447 = vpop.f32.mrf.mxu0
    %v448 = vadd.f32 0.0, %v447
    %v449 = vpop.f32.mrf.mxu0
    %450 = vdwg.mxu0
    %451 = vmatprep.subr.mxu0 0.0
    %452 = vmatpush1.xpose.msra.mxu0 0.0
    %453 = vmatprep.subr.mxu0 0.0
    %454 = vmatpush1.xpose.msra.mxu0 0.0
    %455 = vmatprep.subr.mxu0 0.0
    %456 = vmatpush1.xpose.msra.mxu0 0.0
    %457 = vmatprep.subr.mxu0 0.0
    %458 = vmatpush1.xpose.msra.mxu0 0.0
    %459 = vmatprep.subr.mxu0 0.0
    %460 = vmatpush1.xpose.msra.mxu0 0.0
    %461 = vmatprep.subr.mxu0 0.0
    %462 = vmatpush1.xpose.msra.mxu0 0.0
    %463 = vmatprep.subr.mxu0 0.0
    %464 = vmatpush1.xpose.msra.mxu0 0.0
    %465 = vmatprep.subr.mxu0 0.0
    %466 = vmatpush1.xpose.msra.mxu0 0.0
    %467 = vmatprep.subr.mxu0 0.0
    %468 = vmatpush1.xpose.msra.mxu0 0.0
    %469 = vmatprep.subr.mxu0 0.0
    %470 = vmatpush1.xpose.msra.mxu0 0.0
    %471 = vmatprep.subr.mxu0 0.0
    %472 = vmatpush1.xpose.msra.mxu0 0.0
    %473 = vmatprep.subr.mxu0 0.0
    %474 = vmatpush1.xpose.msra.mxu0 0.0
    %475 = vmatprep.subr.mxu0 0.0
    %476 = vmatpush1.xpose.msra.mxu0 %v364
    %477 = vmatprep.subr.mxu0 0.0
    %478 = vmatpush1.xpose.msra.mxu0 %v361
    %479 = vmatprep.subr.mxu0 0.0
    %480 = vmatpush1.xpose.msra.mxu0 %v358
    %481 = vmatprep.subr.mxu0 0.0
    %482 = vmatpush1.xpose.msra.mxu0 %v355
    %483 = vmatprep.subr.mxu0 0.0
    %484 = vmatpush2.xpose.msra.mxu0 0.0
    %485 = vmatprep.subr.mxu0 0.0
    %486 = vmatpush2.xpose.msra.mxu0 0.0
    %487 = vmatprep.subr.mxu0 0.0
    %488 = vmatpush2.xpose.msra.mxu0 0.0
    %489 = vmatprep.subr.mxu0 0.0
    %490 = vmatpush2.xpose.msra.mxu0 0.0
    %491 = vmatprep.subr.mxu0 0.0
    %492 = vmatpush2.xpose.msra.mxu0 0.0
    %493 = vmatprep.subr.mxu0 0.0
    %494 = vmatpush2.xpose.msra.mxu0 0.0
    %495 = vmatprep.subr.mxu0 0.0
    %496 = vmatpush2.xpose.msra.mxu0 0.0
    %497 = vmatprep.subr.mxu0 0.0
    %498 = vmatpush2.xpose.msra.mxu0 0.0
    %499 = vmatprep.subr.mxu0 0.0
    %500 = vmatpush2.xpose.msra.mxu0 0.0
    %501 = vmatprep.subr.mxu0 0.0
    %502 = vmatpush2.xpose.msra.mxu0 0.0
    %503 = vmatprep.subr.mxu0 0.0
    %504 = vmatpush2.xpose.msra.mxu0 0.0
    %505 = vmatprep.subr.mxu0 0.0
    %506 = vmatpush2.xpose.msra.mxu0 0.0
    %507 = vmatprep.subr.mxu0 0.0
    %508 = vmatpush2.xpose.msra.mxu0 0.0
    %509 = vmatprep.subr.mxu0 0.0
    %510 = vmatpush2.xpose.msra.mxu0 0.0
    %511 = vmatprep.subr.mxu0 0.0
    %512 = vmatpush2.xpose.msra.mxu0 0.0
    %513 = vmatprep.subr.mxu0 0.0
    %514 = vmatpush2.xpose.msra.mxu0 0.0
    %515 = vmatprep.mubr.f32.mxu0 0.0
    %516 = vmatmul.mubr.f32.gmra.mxu0 %v282
    %v517 = vpop.f32.mrf.mxu0
    %v518 = vadd.f32 0.0, %v517
    %v519 = vpop.f32.mrf.mxu0
    %520 = vdwg.mxu0
    %522 = vset.pattern.permute.xlu0 0
    %523 = vperm.xlu0 %522, %v268
    %v524 = vpop.permute.xlu0 %523
    %527 = vset.pattern.permute.xlu0 0
    %528 = vperm.xlu0 %527, %v273
    %v529 = vpop.permute.xlu0 %528
    %532 = vset.pattern.permute.xlu0 0
    %533 = vperm.xlu0 %532, %v278
    %v534 = vpop.permute.xlu0 %533
    %v536 = vlaneseq
    %v537 = vshrl.u32 %v536, 7
    %v538 = vsub.s32 0, %v537
    %v539 = vrot.slane %v351, %v538
    %v540 = vadd.f32 %v524, %v539
    %v541 = vadd.f32 %v529, %v539
    %v542 = vadd.f32 %v534, %v539
    %v544 = vsel %vm191, %v115, 0
    %v547 = vsel %vm191, %v120, 0
    %v550 = vsel %vm191, %v125, 0
    %552 = vmatprep.subr.mxu0 0.0
    %553 = vmatpush1.xpose.msra.mxu0 0.0
    %554 = vmatprep.subr.mxu0 0.0
    %555 = vmatpush1.xpose.msra.mxu0 0.0
    %556 = vmatprep.subr.mxu0 0.0
    %557 = vmatpush1.xpose.msra.mxu0 0.0
    %558 = vmatprep.subr.mxu0 0.0
    %559 = vmatpush1.xpose.msra.mxu0 0.0
    %560 = vmatprep.subr.mxu0 0.0
    %561 = vmatpush1.xpose.msra.mxu0 0.0
    %562 = vmatprep.subr.mxu0 0.0
    %563 = vmatpush1.xpose.msra.mxu0 0.0
    %564 = vmatprep.subr.mxu0 0.0
    %565 = vmatpush1.xpose.msra.mxu0 0.0
    %566 = vmatprep.subr.mxu0 0.0
    %567 = vmatpush1.xpose.msra.mxu0 0.0
    %568 = vmatprep.subr.mxu0 0.0
    %569 = vmatpush1.xpose.msra.mxu0 0.0
    %570 = vmatprep.subr.mxu0 0.0
    %571 = vmatpush1.xpose.msra.mxu0 0.0
    %572 = vmatprep.subr.mxu0 0.0
    %573 = vmatpush1.xpose.msra.mxu0 0.0
    %574 = vmatprep.subr.mxu0 0.0
    %575 = vmatpush1.xpose.msra.mxu0 0.0
    %576 = vmatprep.subr.mxu0 0.0
    %577 = vmatpush1.xpose.msra.mxu0 0.0
    %578 = vmatprep.subr.mxu0 0.0
    %579 = vmatpush1.xpose.msra.mxu0 %v550
    %580 = vmatprep.subr.mxu0 0.0
    %581 = vmatpush1.xpose.msra.mxu0 %v547
    %582 = vmatprep.subr.mxu0 0.0
    %583 = vmatpush1.xpose.msra.mxu0 %v544
    %584 = vmatprep.subr.mxu0 0.0
    %585 = vmatpush2.xpose.msra.mxu0 0.0
    %586 = vmatprep.subr.mxu0 0.0
    %587 = vmatpush2.xpose.msra.mxu0 0.0
    %588 = vmatprep.subr.mxu0 0.0
    %589 = vmatpush2.xpose.msra.mxu0 0.0
    %590 = vmatprep.subr.mxu0 0.0
    %591 = vmatpush2.xpose.msra.mxu0 0.0
    %592 = vmatprep.subr.mxu0 0.0
    %593 = vmatpush2.xpose.msra.mxu0 0.0
    %594 = vmatprep.subr.mxu0 0.0
    %595 = vmatpush2.xpose.msra.mxu0 0.0
    %596 = vmatprep.subr.mxu0 0.0
    %597 = vmatpush2.xpose.msra.mxu0 0.0
    %598 = vmatprep.subr.mxu0 0.0
    %599 = vmatpush2.xpose.msra.mxu0 0.0
    %600 = vmatprep.subr.mxu0 0.0
    %601 = vmatpush2.xpose.msra.mxu0 0.0
    %602 = vmatprep.subr.mxu0 0.0
    %603 = vmatpush2.xpose.msra.mxu0 0.0
    %604 = vmatprep.subr.mxu0 0.0
    %605 = vmatpush2.xpose.msra.mxu0 0.0
    %606 = vmatprep.subr.mxu0 0.0
    %607 = vmatpush2.xpose.msra.mxu0 0.0
    %608 = vmatprep.subr.mxu0 0.0
    %609 = vmatpush2.xpose.msra.mxu0 0.0
    %610 = vmatprep.subr.mxu0 0.0
    %611 = vmatpush2.xpose.msra.mxu0 0.0
    %612 = vmatprep.subr.mxu0 0.0
    %613 = vmatpush2.xpose.msra.mxu0 0.0
    %614 = vmatprep.subr.mxu0 0.0
    %615 = vmatpush2.xpose.msra.mxu0 0.0
    %616 = vmatprep.mubr.f32.mxu0 0.0
    %617 = vmatmul.mubr.f32.gmra.mxu0 %v544
    %v618 = vpop.f32.mrf.mxu0
    %v619 = vadd.f32 0.0, %v618
    %v620 = vpop.f32.mrf.mxu0
    %621 = vmatprep.mubr.f32.mxu0 0.0
    %622 = vmatmul.mubr.f32.gmra.mxu0 %v547
    %v623 = vpop.f32.mrf.mxu0
    %v624 = vadd.f32 0.0, %v623
    %v625 = vpop.f32.mrf.mxu0
    %626 = vmatprep.mubr.f32.mxu0 0.0
    %627 = vmatmul.mubr.f32.gmra.mxu0 %v550
    %v628 = vpop.f32.mrf.mxu0
    %v629 = vadd.f32 0.0, %v628
    %v630 = vpop.f32.mrf.mxu0
    %631 = vdwg.mxu0
    %v632 = vmul.f32 %v619, 2.0
    %v633 = vmul.f32 %v624, 2.0
    %v634 = vmul.f32 %v629, 2.0
    %v635 = vsub.f32 %v540, %v632
    %v636 = vsub.f32 %v541, %v633
    %v637 = vsub.f32 %v542, %v634
    %v638 = vstv %s25
    %v639 = vmul.f32 %v635, %v638
    %v640 = vmul.f32 %v636, %v638
    %v641 = vmul.f32 %v637, %v638
    %v642 = vmul.f32 %v639, 1.442695
    %v643 = vpow.pop %v642
    %v644 = vmul.f32 %v640, 1.442695
    %v645 = vpow.pop %v644
    %v646 = vmul.f32 %v641, 1.442695
    %v647 = vpow.pop %v646
    %vm648 = vcmask 195584
    %v650 = vsel %vm648, %v643, 0
    %v653 = vsel %vm648, %v645, 0
    %v656 = vsel %vm648, %v647, 0
    %658 = vmatprep.subr.mxu0 0.0
    %659 = vmatpush1.msra.mxu0 0.0
    %660 = vmatprep.subr.mxu0 0.0
    %661 = vmatpush1.msra.mxu0 0.0
    %662 = vmatprep.subr.mxu0 0.0
    %663 = vmatpush1.msra.mxu0 0.0
    %664 = vmatprep.subr.mxu0 0.0
    %665 = vmatpush1.msra.mxu0 0.0
    %666 = vmatprep.subr.mxu0 0.0
    %667 = vmatpush1.msra.mxu0 0.0
    %668 = vmatprep.subr.mxu0 0.0
    %669 = vmatpush1.msra.mxu0 0.0
    %670 = vmatprep.subr.mxu0 0.0
    %671 = vmatpush1.msra.mxu0 0.0
    %672 = vmatprep.subr.mxu0 0.0
    %673 = vmatpush1.msra.mxu0 0.0
    %674 = vmatprep.subr.mxu0 0.0
    %675 = vmatpush1.msra.mxu0 0.0
    %676 = vmatprep.subr.mxu0 0.0
    %677 = vmatpush1.msra.mxu0 0.0
    %678 = vmatprep.subr.mxu0 0.0
    %679 = vmatpush1.msra.mxu0 0.0
    %680 = vmatprep.subr.mxu0 0.0
    %681 = vmatpush1.msra.mxu0 0.0
    %682 = vmatprep.subr.mxu0 0.0
    %683 = vmatpush1.msra.mxu0 0.0
    %684 = vmatprep.subr.mxu0 0.0
    %685 = vmatpush1.msra.mxu0 %v170
    %686 = vmatprep.subr.mxu0 0.0
    %687 = vmatpush1.msra.mxu0 %v169
    %688 = vmatprep.subr.mxu0 0.0
    %689 = vmatpush1.msra.mxu0 %v168
    %690 = vmatprep.subr.mxu0 0.0
    %691 = vmatpush2.msra.mxu0 0.0
    %692 = vmatprep.subr.mxu0 0.0
    %693 = vmatpush2.msra.mxu0 0.0
    %694 = vmatprep.subr.mxu0 0.0
    %695 = vmatpush2.msra.mxu0 0.0
    %696 = vmatprep.subr.mxu0 0.0
    %697 = vmatpush2.msra.mxu0 0.0
    %698 = vmatprep.subr.mxu0 0.0
    %699 = vmatpush2.msra.mxu0 0.0
    %700 = vmatprep.subr.mxu0 0.0
    %701 = vmatpush2.msra.mxu0 0.0
    %702 = vmatprep.subr.mxu0 0.0
    %703 = vmatpush2.msra.mxu0 0.0
    %704 = vmatprep.subr.mxu0 0.0
    %705 = vmatpush2.msra.mxu0 0.0
    %706 = vmatprep.subr.mxu0 0.0
    %707 = vmatpush2.msra.mxu0 0.0
    %708 = vmatprep.subr.mxu0 0.0
    %709 = vmatpush2.msra.mxu0 0.0
    %710 = vmatprep.subr.mxu0 0.0
    %711 = vmatpush2.msra.mxu0 0.0
    %712 = vmatprep.subr.mxu0 0.0
    %713 = vmatpush2.msra.mxu0 0.0
    %714 = vmatprep.subr.mxu0 0.0
    %715 = vmatpush2.msra.mxu0 0.0
    %716 = vmatprep.subr.mxu0 0.0
    %717 = vmatpush2.msra.mxu0 0.0
    %718 = vmatprep.subr.mxu0 0.0
    %719 = vmatpush2.msra.mxu0 0.0
    %720 = vmatprep.subr.mxu0 0.0
    %721 = vmatpush2.msra.mxu0 0.0
    %722 = vmatprep.mubr.f32.mxu0 0.0
    %723 = vmatmul.mubr.f32.gmra.mxu0 %v650
    %v724 = vpop.f32.mrf.mxu0
    %v725 = vadd.f32 0.0, %v724
    %v726 = vpop.f32.mrf.mxu0
    %727 = vmatprep.mubr.f32.mxu0 0.0
    %728 = vmatmul.mubr.f32.gmra.mxu0 %v653
    %v729 = vpop.f32.mrf.mxu0
    %v730 = vadd.f32 0.0, %v729
    %v731 = vpop.f32.mrf.mxu0
    %732 = vmatprep.mubr.f32.mxu0 0.0
    %733 = vmatmul.mubr.f32.gmra.mxu0 %v656
    %v734 = vpop.f32.mrf.mxu0
    %v735 = vadd.f32 0.0, %v734
    %v736 = vpop.f32.mrf.mxu0
    %737 = vdwg.mxu0
    %v738 = vmul.f32 %v168, %v725
    %v739 = vmul.f32 %v169, %v730
    %v740 = vmul.f32 %v170, %v735
    %v741 = vsel %vm155, %v738, 0.0
    %v742 = vsel %vm155, %v739, 0.0
    %v743 = vadd.f32 %v741, %v742
    %v744 = vsel %vm155, %v740, 0.0
    %v745 = vadd.f32 %v743, %v744
    %v746 = vrot.slane %v745, 4
    %v747 = vadd.f32 %v745, %v746
    %v748 = vrot.slane %v747, 2
    %v749 = vadd.f32 %v747, %v748
    %v750 = vrot.slane %v749, 1
    %v751 = vadd.f32 %v749, %v750
    %753 = vset.pattern.permute.xlu0 0
    %754 = vperm.xlu0 %753, %v433
    %v755 = vpop.permute.xlu0 %754
    %758 = vset.pattern.permute.xlu0 0
    %759 = vperm.xlu0 %758, %v438
    %v760 = vpop.permute.xlu0 %759
    %763 = vset.pattern.permute.xlu0 0
    %764 = vperm.xlu0 %763, %v443
    %v765 = vpop.permute.xlu0 %764
    %768 = vset.pattern.permute.xlu0 0
    %769 = vperm.xlu0 %768, %v448
    %v770 = vpop.permute.xlu0 %769
    %v772 = vadd.f32 %v755, %v539
    %v773 = vadd.f32 %v760, %v539
    %v774 = vadd.f32 %v765, %v539
    %v775 = vadd.f32 %v770, %v539
    %v777 = vsel %vm191, %v128, 0
    %v780 = vsel %vm191, %v129, 0
    %v783 = vsel %vm191, %v130, 0
    %v786 = vsel %vm191, %v131, 0
    %788 = vmatprep.subr.mxu0 0.0
    %789 = vmatpush1.xpose.msra.mxu0 0.0
    %790 = vmatprep.subr.mxu0 0.0
    %791 = vmatpush1.xpose.msra.mxu0 0.0
    %792 = vmatprep.subr.mxu0 0.0
    %793 = vmatpush1.xpose.msra.mxu0 0.0
    %794 = vmatprep.subr.mxu0 0.0
    %795 = vmatpush1.xpose.msra.mxu0 0.0
    %796 = vmatprep.subr.mxu0 0.0
    %797 = vmatpush1.xpose.msra.mxu0 0.0
    %798 = vmatprep.subr.mxu0 0.0
    %799 = vmatpush1.xpose.msra.mxu0 0.0
    %800 = vmatprep.subr.mxu0 0.0
    %801 = vmatpush1.xpose.msra.mxu0 0.0
    %802 = vmatprep.subr.mxu0 0.0
    %803 = vmatpush1.xpose.msra.mxu0 0.0
    %804 = vmatprep.subr.mxu0 0.0
    %805 = vmatpush1.xpose.msra.mxu0 0.0
    %806 = vmatprep.subr.mxu0 0.0
    %807 = vmatpush1.xpose.msra.mxu0 0.0
    %808 = vmatprep.subr.mxu0 0.0
    %809 = vmatpush1.xpose.msra.mxu0 0.0
    %810 = vmatprep.subr.mxu0 0.0
    %811 = vmatpush1.xpose.msra.mxu0 0.0
    %812 = vmatprep.subr.mxu0 0.0
    %813 = vmatpush1.xpose.msra.mxu0 0.0
    %814 = vmatprep.subr.mxu0 0.0
    %815 = vmatpush1.xpose.msra.mxu0 %v550
    %816 = vmatprep.subr.mxu0 0.0
    %817 = vmatpush1.xpose.msra.mxu0 %v547
    %818 = vmatprep.subr.mxu0 0.0
    %819 = vmatpush1.xpose.msra.mxu0 %v544
    %820 = vmatprep.subr.mxu0 0.0
    %821 = vmatpush2.xpose.msra.mxu0 0.0
    %822 = vmatprep.subr.mxu0 0.0
    %823 = vmatpush2.xpose.msra.mxu0 0.0
    %824 = vmatprep.subr.mxu0 0.0
    %825 = vmatpush2.xpose.msra.mxu0 0.0
    %826 = vmatprep.subr.mxu0 0.0
    %827 = vmatpush2.xpose.msra.mxu0 0.0
    %828 = vmatprep.subr.mxu0 0.0
    %829 = vmatpush2.xpose.msra.mxu0 0.0
    %830 = vmatprep.subr.mxu0 0.0
    %831 = vmatpush2.xpose.msra.mxu0 0.0
    %832 = vmatprep.subr.mxu0 0.0
    %833 = vmatpush2.xpose.msra.mxu0 0.0
    %834 = vmatprep.subr.mxu0 0.0
    %835 = vmatpush2.xpose.msra.mxu0 0.0
    %836 = vmatprep.subr.mxu0 0.0
    %837 = vmatpush2.xpose.msra.mxu0 0.0
    %838 = vmatprep.subr.mxu0 0.0
    %839 = vmatpush2.xpose.msra.mxu0 0.0
    %840 = vmatprep.subr.mxu0 0.0
    %841 = vmatpush2.xpose.msra.mxu0 0.0
    %842 = vmatprep.subr.mxu0 0.0
    %843 = vmatpush2.xpose.msra.mxu0 0.0
    %844 = vmatprep.subr.mxu0 0.0
    %845 = vmatpush2.xpose.msra.mxu0 0.0
    %846 = vmatprep.subr.mxu0 0.0
    %847 = vmatpush2.xpose.msra.mxu0 0.0
    %848 = vmatprep.subr.mxu0 0.0
    %849 = vmatpush2.xpose.msra.mxu0 0.0
    %850 = vmatprep.subr.mxu0 0.0
    %851 = vmatpush2.xpose.msra.mxu0 0.0
    %852 = vmatprep.mubr.f32.mxu0 0.0
    %853 = vmatmul.mubr.f32.gmra.mxu0 %v777
    %v854 = vpop.f32.mrf.mxu0
    %v855 = vadd.f32 0.0, %v854
    %v856 = vpop.f32.mrf.mxu0
    %857 = vmatprep.mubr.f32.mxu0 0.0
    %858 = vmatmul.mubr.f32.gmra.mxu0 %v780
    %v859 = vpop.f32.mrf.mxu0
    %v860 = vadd.f32 0.0, %v859
    %v861 = vpop.f32.mrf.mxu0
    %862 = vmatprep.mubr.f32.mxu0 0.0
    %863 = vmatmul.mubr.f32.gmra.mxu0 %v783
    %v864 = vpop.f32.mrf.mxu0
    %v865 = vadd.f32 0.0, %v864
    %v866 = vpop.f32.mrf.mxu0
    %867 = vmatprep.mubr.f32.mxu0 0.0
    %868 = vmatmul.mubr.f32.gmra.mxu0 %v786
    %v869 = vpop.f32.mrf.mxu0
    %v870 = vadd.f32 0.0, %v869
    %v871 = vpop.f32.mrf.mxu0
    %872 = vdwg.mxu0
    %v873 = vmul.f32 %v855, 2.0
    %v874 = vmul.f32 %v860, 2.0
    %v875 = vmul.f32 %v865, 2.0
    %v876 = vmul.f32 %v870, 2.0
    %v877 = vsub.f32 %v772, %v873
    %v878 = vsub.f32 %v773, %v874
    %v879 = vsub.f32 %v774, %v875
    %v880 = vsub.f32 %v775, %v876
    %v881 = vmul.f32 %v877, %v638
    %v882 = vmul.f32 %v878, %v638
    %v883 = vmul.f32 %v879, %v638
    %v884 = vmul.f32 %v880, %v638
    %v885 = vmul.f32 %v881, 1.442695
    %v886 = vpow.pop %v885
    %v887 = vmul.f32 %v882, 1.442695
    %v888 = vpow.pop %v887
    %v889 = vmul.f32 %v883, 1.442695
    %v890 = vpow.pop %v889
    %v891 = vmul.f32 %v884, 1.442695
    %v892 = vpow.pop %v891
    %v894 = vsel %vm648, %v886, 0
    %v897 = vsel %vm648, %v888, 0
    %v900 = vsel %vm648, %v890, 0
    %v903 = vsel %vm648, %v892, 0
    %905 = vmatprep.subr.mxu0 0.0
    %906 = vmatpush1.msra.mxu0 0.0
    %907 = vmatprep.subr.mxu0 0.0
    %908 = vmatpush1.msra.mxu0 0.0
    %909 = vmatprep.subr.mxu0 0.0
    %910 = vmatpush1.msra.mxu0 0.0
    %911 = vmatprep.subr.mxu0 0.0
    %912 = vmatpush1.msra.mxu0 0.0
    %913 = vmatprep.subr.mxu0 0.0
    %914 = vmatpush1.msra.mxu0 0.0
    %915 = vmatprep.subr.mxu0 0.0
    %916 = vmatpush1.msra.mxu0 0.0
    %917 = vmatprep.subr.mxu0 0.0
    %918 = vmatpush1.msra.mxu0 0.0
    %919 = vmatprep.subr.mxu0 0.0
    %920 = vmatpush1.msra.mxu0 0.0
    %921 = vmatprep.subr.mxu0 0.0
    %922 = vmatpush1.msra.mxu0 0.0
    %923 = vmatprep.subr.mxu0 0.0
    %924 = vmatpush1.msra.mxu0 0.0
    %925 = vmatprep.subr.mxu0 0.0
    %926 = vmatpush1.msra.mxu0 0.0
    %927 = vmatprep.subr.mxu0 0.0
    %928 = vmatpush1.msra.mxu0 0.0
    %929 = vmatprep.subr.mxu0 0.0
    %930 = vmatpush1.msra.mxu0 0.0
    %931 = vmatprep.subr.mxu0 0.0
    %932 = vmatpush1.msra.mxu0 %v170
    %933 = vmatprep.subr.mxu0 0.0
    %934 = vmatpush1.msra.mxu0 %v169
    %935 = vmatprep.subr.mxu0 0.0
    %936 = vmatpush1.msra.mxu0 %v168
    %937 = vmatprep.subr.mxu0 0.0
    %938 = vmatpush2.msra.mxu0 0.0
    %939 = vmatprep.subr.mxu0 0.0
    %940 = vmatpush2.msra.mxu0 0.0
    %941 = vmatprep.subr.mxu0 0.0
    %942 = vmatpush2.msra.mxu0 0.0
    %943 = vmatprep.subr.mxu0 0.0
    %944 = vmatpush2.msra.mxu0 0.0
    %945 = vmatprep.subr.mxu0 0.0
    %946 = vmatpush2.msra.mxu0 0.0
    %947 = vmatprep.subr.mxu0 0.0
    %948 = vmatpush2.msra.mxu0 0.0
    %949 = vmatprep.subr.mxu0 0.0
    %950 = vmatpush2.msra.mxu0 0.0
    %951 = vmatprep.subr.mxu0 0.0
    %952 = vmatpush2.msra.mxu0 0.0
    %953 = vmatprep.subr.mxu0 0.0
    %954 = vmatpush2.msra.mxu0 0.0
    %955 = vmatprep.subr.mxu0 0.0
    %956 = vmatpush2.msra.mxu0 0.0
    %957 = vmatprep.subr.mxu0 0.0
    %958 = vmatpush2.msra.mxu0 0.0
    %959 = vmatprep.subr.mxu0 0.0
    %960 = vmatpush2.msra.mxu0 0.0
    %961 = vmatprep.subr.mxu0 0.0
    %962 = vmatpush2.msra.mxu0 0.0
    %963 = vmatprep.subr.mxu0 0.0
    %964 = vmatpush2.msra.mxu0 0.0
    %965 = vmatprep.subr.mxu0 0.0
    %966 = vmatpush2.msra.mxu0 0.0
    %967 = vmatprep.subr.mxu0 0.0
    %968 = vmatpush2.msra.mxu0 0.0
    %969 = vmatprep.mubr.f32.mxu0 0.0
    %970 = vmatmul.mubr.f32.gmra.mxu0 %v894
    %v971 = vpop.f32.mrf.mxu0
    %v972 = vadd.f32 0.0, %v971
    %v973 = vpop.f32.mrf.mxu0
    %974 = vmatprep.mubr.f32.mxu0 0.0
    %975 = vmatmul.mubr.f32.gmra.mxu0 %v897
    %v976 = vpop.f32.mrf.mxu0
    %v977 = vadd.f32 0.0, %v976
    %v978 = vpop.f32.mrf.mxu0
    %979 = vmatprep.mubr.f32.mxu0 0.0
    %980 = vmatmul.mubr.f32.gmra.mxu0 %v900
    %v981 = vpop.f32.mrf.mxu0
    %v982 = vadd.f32 0.0, %v981
    %v983 = vpop.f32.mrf.mxu0
    %984 = vmatprep.mubr.f32.mxu0 0.0
    %985 = vmatmul.mubr.f32.gmra.mxu0 %v903
    %v986 = vpop.f32.mrf.mxu0
    %v987 = vadd.f32 0.0, %v986
    %v988 = vpop.f32.mrf.mxu0
    %989 = vdwg.mxu0
    %v991 = vsel %vm191, %v180, 0
    %993 = vmatprep.subr.mxu0 0.0
    %994 = vmatpush1.msra.mxu0 0.0
    %995 = vmatprep.subr.mxu0 0.0
    %996 = vmatpush1.msra.mxu0 0.0
    %997 = vmatprep.subr.mxu0 0.0
    %998 = vmatpush1.msra.mxu0 0.0
    %999 = vmatprep.subr.mxu0 0.0
    %1000 = vmatpush1.msra.mxu0 0.0
    %1001 = vmatprep.subr.mxu0 0.0
    %1002 = vmatpush1.msra.mxu0 0.0
    %1003 = vmatprep.subr.mxu0 0.0
    %1004 = vmatpush1.msra.mxu0 0.0
    %1005 = vmatprep.subr.mxu0 0.0
    %1006 = vmatpush1.msra.mxu0 0.0
    %1007 = vmatprep.subr.mxu0 0.0
    %1008 = vmatpush1.msra.mxu0 0.0
    %1009 = vmatprep.subr.mxu0 0.0
    %1010 = vmatpush1.msra.mxu0 0.0
    %1011 = vmatprep.subr.mxu0 0.0
    %1012 = vmatpush1.msra.mxu0 0.0
    %1013 = vmatprep.subr.mxu0 0.0
    %1014 = vmatpush1.msra.mxu0 0.0
    %1015 = vmatprep.subr.mxu0 0.0
    %1016 = vmatpush1.msra.mxu0 0.0
    %1017 = vmatprep.subr.mxu0 0.0
    %1018 = vmatpush1.msra.mxu0 %v987
    %1019 = vmatprep.subr.mxu0 0.0
    %1020 = vmatpush1.msra.mxu0 %v982
    %1021 = vmatprep.subr.mxu0 0.0
    %1022 = vmatpush1.msra.mxu0 %v977
    %1023 = vmatprep.subr.mxu0 0.0
    %1024 = vmatpush1.msra.mxu0 %v972
    %1025 = vmatprep.subr.mxu0 0.0
    %1026 = vmatpush2.msra.mxu0 0.0
    %1027 = vmatprep.subr.mxu0 0.0
    %1028 = vmatpush2.msra.mxu0 0.0
    %1029 = vmatprep.subr.mxu0 0.0
    %1030 = vmatpush2.msra.mxu0 0.0
    %1031 = vmatprep.subr.mxu0 0.0
    %1032 = vmatpush2.msra.mxu0 0.0
    %1033 = vmatprep.subr.mxu0 0.0
    %1034 = vmatpush2.msra.mxu0 0.0
    %1035 = vmatprep.subr.mxu0 0.0
    %1036 = vmatpush2.msra.mxu0 0.0
    %1037 = vmatprep.subr.mxu0 0.0
    %1038 = vmatpush2.msra.mxu0 0.0
    %1039 = vmatprep.subr.mxu0 0.0
    %1040 = vmatpush2.msra.mxu0 0.0
    %1041 = vmatprep.subr.mxu0 0.0
    %1042 = vmatpush2.msra.mxu0 0.0
    %1043 = vmatprep.subr.mxu0 0.0
    %1044 = vmatpush2.msra.mxu0 0.0
    %1045 = vmatprep.subr.mxu0 0.0
    %1046 = vmatpush2.msra.mxu0 0.0
    %1047 = vmatprep.subr.mxu0 0.0
    %1048 = vmatpush2.msra.mxu0 0.0
    %1049 = vmatprep.subr.mxu0 0.0
    %1050 = vmatpush2.msra.mxu0 0.0
    %1051 = vmatprep.subr.mxu0 0.0
    %1052 = vmatpush2.msra.mxu0 0.0
    %1053 = vmatprep.subr.mxu0 0.0
    %1054 = vmatpush2.msra.mxu0 0.0
    %1055 = vmatprep.subr.mxu0 0.0
    %1056 = vmatpush2.msra.mxu0 0.0
    %1057 = vmatprep.mubr.f32.mxu0 0.0
    %1058 = vmatmul.mubr.f32.gmra.mxu0 %v991
    %v1059 = vpop.f32.mrf.mxu0
    %v1060 = vadd.f32 0.0, %v1059
    %v1061 = vpop.f32.mrf.mxu0
    %1062 = vdwg.mxu0
    %v1063 = vmul.f32 %v1060, 0.125
    %v1064 = vlaneseq
    %v1065 = vshrl.u32 %v1064, 7
    %v1066 = vsub.s32 0, %v1065
    %v1067 = vrot.slane %v518, %v1066
    %v1068 = vadd.f32 %v755, %v1067
    %v1069 = vadd.f32 %v760, %v1067
    %v1070 = vadd.f32 %v765, %v1067
    %v1071 = vadd.f32 %v770, %v1067
    %1072 = vmatprep.subr.mxu0 0.0
    %1073 = vmatpush1.xpose.msra.mxu0 0.0
    %1074 = vmatprep.subr.mxu0 0.0
    %1075 = vmatpush1.xpose.msra.mxu0 0.0
    %1076 = vmatprep.subr.mxu0 0.0
    %1077 = vmatpush1.xpose.msra.mxu0 0.0
    %1078 = vmatprep.subr.mxu0 0.0
    %1079 = vmatpush1.xpose.msra.mxu0 0.0
    %1080 = vmatprep.subr.mxu0 0.0
    %1081 = vmatpush1.xpose.msra.mxu0 0.0
    %1082 = vmatprep.subr.mxu0 0.0
    %1083 = vmatpush1.xpose.msra.mxu0 0.0
    %1084 = vmatprep.subr.mxu0 0.0
    %1085 = vmatpush1.xpose.msra.mxu0 0.0
    %1086 = vmatprep.subr.mxu0 0.0
    %1087 = vmatpush1.xpose.msra.mxu0 0.0
    %1088 = vmatprep.subr.mxu0 0.0
    %1089 = vmatpush1.xpose.msra.mxu0 0.0
    %1090 = vmatprep.subr.mxu0 0.0
    %1091 = vmatpush1.xpose.msra.mxu0 0.0
    %1092 = vmatprep.subr.mxu0 0.0
    %1093 = vmatpush1.xpose.msra.mxu0 0.0
    %1094 = vmatprep.subr.mxu0 0.0
    %1095 = vmatpush1.xpose.msra.mxu0 0.0
    %1096 = vmatprep.subr.mxu0 0.0
    %1097 = vmatpush1.xpose.msra.mxu0 %v786
    %1098 = vmatprep.subr.mxu0 0.0
    %1099 = vmatpush1.xpose.msra.mxu0 %v783
    %1100 = vmatprep.subr.mxu0 0.0
    %1101 = vmatpush1.xpose.msra.mxu0 %v780
    %1102 = vmatprep.subr.mxu0 0.0
    %1103 = vmatpush1.xpose.msra.mxu0 %v777
    %1104 = vmatprep.subr.mxu0 0.0
    %1105 = vmatpush2.xpose.msra.mxu0 0.0
    %1106 = vmatprep.subr.mxu0 0.0
    %1107 = vmatpush2.xpose.msra.mxu0 0.0
    %1108 = vmatprep.subr.mxu0 0.0
    %1109 = vmatpush2.xpose.msra.mxu0 0.0
    %1110 = vmatprep.subr.mxu0 0.0
    %1111 = vmatpush2.xpose.msra.mxu0 0.0
    %1112 = vmatprep.subr.mxu0 0.0
    %1113 = vmatpush2.xpose.msra.mxu0 0.0
    %1114 = vmatprep.subr.mxu0 0.0
    %1115 = vmatpush2.xpose.msra.mxu0 0.0
    %1116 = vmatprep.subr.mxu0 0.0
    %1117 = vmatpush2.xpose.msra.mxu0 0.0
    %1118 = vmatprep.subr.mxu0 0.0
    %1119 = vmatpush2.xpose.msra.mxu0 0.0
    %1120 = vmatprep.subr.mxu0 0.0
    %1121 = vmatpush2.xpose.msra.mxu0 0.0
    %1122 = vmatprep.subr.mxu0 0.0
    %1123 = vmatpush2.xpose.msra.mxu0 0.0
    %1124 = vmatprep.subr.mxu0 0.0
    %1125 = vmatpush2.xpose.msra.mxu0 0.0
    %1126 = vmatprep.subr.mxu0 0.0
    %1127 = vmatpush2.xpose.msra.mxu0 0.0
    %1128 = vmatprep.subr.mxu0 0.0
    %1129 = vmatpush2.xpose.msra.mxu0 0.0
    %1130 = vmatprep.subr.mxu0 0.0
    %1131 = vmatpush2.xpose.msra.mxu0 0.0
    %1132 = vmatprep.subr.mxu0 0.0
    %1133 = vmatpush2.xpose.msra.mxu0 0.0
    %1134 = vmatprep.subr.mxu0 0.0
    %1135 = vmatpush2.xpose.msra.mxu0 0.0
    %1136 = vmatprep.mubr.f32.mxu0 0.0
    %1137 = vmatmul.mubr.f32.gmra.mxu0 %v777
    %v1138 = vpop.f32.mrf.mxu0
    %v1139 = vadd.f32 0.0, %v1138
    %v1140 = vpop.f32.mrf.mxu0
    %1141 = vmatprep.mubr.f32.mxu0 0.0
    %1142 = vmatmul.mubr.f32.gmra.mxu0 %v780
    %v1143 = vpop.f32.mrf.mxu0
    %v1144 = vadd.f32 0.0, %v1143
    %v1145 = vpop.f32.mrf.mxu0
    %1146 = vmatprep.mubr.f32.mxu0 0.0
    %1147 = vmatmul.mubr.f32.gmra.mxu0 %v783
    %v1148 = vpop.f32.mrf.mxu0
    %v1149 = vadd.f32 0.0, %v1148
    %v1150 = vpop.f32.mrf.mxu0
    %1151 = vmatprep.mubr.f32.mxu0 0.0
    %1152 = vmatmul.mubr.f32.gmra.mxu0 %v786
    %v1153 = vpop.f32.mrf.mxu0
    %v1154 = vadd.f32 0.0, %v1153
    %v1155 = vpop.f32.mrf.mxu0
    %1156 = vdwg.mxu0
    %v1157 = vmul.f32 %v1139, 2.0
    %v1158 = vmul.f32 %v1144, 2.0
    %v1159 = vmul.f32 %v1149, 2.0
    %v1160 = vmul.f32 %v1154, 2.0
    %v1161 = vsub.f32 %v1068, %v1157
    %v1162 = vsub.f32 %v1069, %v1158
    %v1163 = vsub.f32 %v1070, %v1159
    %v1164 = vsub.f32 %v1071, %v1160
    %v1165 = vmul.f32 %v1161, %v638
    %v1166 = vmul.f32 %v1162, %v638
    %v1167 = vmul.f32 %v1163, %v638
    %v1168 = vmul.f32 %v1164, %v638
    %v1169 = vmul.f32 %v1165, 1.442695
    %v1170 = vpow.pop %v1169
    %v1171 = vmul.f32 %v1166, 1.442695
    %v1172 = vpow.pop %v1171
    %v1173 = vmul.f32 %v1167, 1.442695
    %v1174 = vpow.pop %v1173
    %v1175 = vmul.f32 %v1168, 1.442695
    %v1176 = vpow.pop %v1175
    %v1178 = vsel %vm191, %v1170, 0
    %v1181 = vsel %vm191, %v1172, 0
    %v1184 = vsel %vm191, %v1174, 0
    %v1187 = vsel %vm191, %v1176, 0
    %1189 = vmatprep.subr.mxu0 0.0
    %1190 = vmatpush1.xpose.msra.mxu0 0.0
    %1191 = vmatprep.subr.mxu0 0.0
    %1192 = vmatpush1.xpose.msra.mxu0 0.0
    %1193 = vmatprep.subr.mxu0 0.0
    %1194 = vmatpush1.xpose.msra.mxu0 0.0
    %1195 = vmatprep.subr.mxu0 0.0
    %1196 = vmatpush1.xpose.msra.mxu0 0.0
    %1197 = vmatprep.subr.mxu0 0.0
    %1198 = vmatpush1.xpose.msra.mxu0 0.0
    %1199 = vmatprep.subr.mxu0 0.0
    %1200 = vmatpush1.xpose.msra.mxu0 0.0
    %1201 = vmatprep.subr.mxu0 0.0
    %1202 = vmatpush1.xpose.msra.mxu0 0.0
    %1203 = vmatprep.subr.mxu0 0.0
    %1204 = vmatpush1.xpose.msra.mxu0 0.0
    %1205 = vmatprep.subr.mxu0 0.0
    %1206 = vmatpush1.xpose.msra.mxu0 0.0
    %1207 = vmatprep.subr.mxu0 0.0
    %1208 = vmatpush1.xpose.msra.mxu0 0.0
    %1209 = vmatprep.subr.mxu0 0.0
    %1210 = vmatpush1.xpose.msra.mxu0 0.0
    %1211 = vmatprep.subr.mxu0 0.0
    %1212 = vmatpush1.xpose.msra.mxu0 0.0
    %1213 = vmatprep.subr.mxu0 0.0
    %1214 = vmatpush1.xpose.msra.mxu0 0.0
    %1215 = vmatprep.subr.mxu0 0.0
    %1216 = vmatpush1.xpose.msra.mxu0 0.0
    %1217 = vmatprep.subr.mxu0 0.0
    %1218 = vmatpush1.xpose.msra.mxu0 0.0
    %1219 = vmatprep.subr.mxu0 0.0
    %1220 = vmatpush1.xpose.msra.mxu0 %v991
    %1221 = vmatprep.subr.mxu0 0.0
    %1222 = vmatpush2.xpose.msra.mxu0 0.0
    %1223 = vmatprep.subr.mxu0 0.0
    %1224 = vmatpush2.xpose.msra.mxu0 0.0
    %1225 = vmatprep.subr.mxu0 0.0
    %1226 = vmatpush2.xpose.msra.mxu0 0.0
    %1227 = vmatprep.subr.mxu0 0.0
    %1228 = vmatpush2.xpose.msra.mxu0 0.0
    %1229 = vmatprep.subr.mxu0 0.0
    %1230 = vmatpush2.xpose.msra.mxu0 0.0
    %1231 = vmatprep.subr.mxu0 0.0
    %1232 = vmatpush2.xpose.msra.mxu0 0.0
    %1233 = vmatprep.subr.mxu0 0.0
    %1234 = vmatpush2.xpose.msra.mxu0 0.0
    %1235 = vmatprep.subr.mxu0 0.0
    %1236 = vmatpush2.xpose.msra.mxu0 0.0
    %1237 = vmatprep.subr.mxu0 0.0
    %1238 = vmatpush2.xpose.msra.mxu0 0.0
    %1239 = vmatprep.subr.mxu0 0.0
    %1240 = vmatpush2.xpose.msra.mxu0 0.0
    %1241 = vmatprep.subr.mxu0 0.0
    %1242 = vmatpush2.xpose.msra.mxu0 0.0
    %1243 = vmatprep.subr.mxu0 0.0
    %1244 = vmatpush2.xpose.msra.mxu0 0.0
    %1245 = vmatprep.subr.mxu0 0.0
    %1246 = vmatpush2.xpose.msra.mxu0 0.0
    %1247 = vmatprep.subr.mxu0 0.0
    %1248 = vmatpush2.xpose.msra.mxu0 0.0
    %1249 = vmatprep.subr.mxu0 0.0
    %1250 = vmatpush2.xpose.msra.mxu0 0.0
    %1251 = vmatprep.subr.mxu0 0.0
    %1252 = vmatpush2.xpose.msra.mxu0 0.0
    %1253 = vmatprep.mubr.f32.mxu0 0.0
    %1254 = vmatmul.mubr.f32.gmra.mxu0 %v1178
    %v1255 = vpop.f32.mrf.mxu0
    %v1256 = vadd.f32 0.0, %v1255
    %v1257 = vpop.f32.mrf.mxu0
    %1258 = vmatprep.mubr.f32.mxu0 0.0
    %1259 = vmatmul.mubr.f32.gmra.mxu0 %v1181
    %v1260 = vpop.f32.mrf.mxu0
    %v1261 = vadd.f32 0.0, %v1260
    %v1262 = vpop.f32.mrf.mxu0
    %1263 = vmatprep.mubr.f32.mxu0 0.0
    %1264 = vmatmul.mubr.f32.gmra.mxu0 %v1184
    %v1265 = vpop.f32.mrf.mxu0
    %v1266 = vadd.f32 0.0, %v1265
    %v1267 = vpop.f32.mrf.mxu0
    %1268 = vmatprep.mubr.f32.mxu0 0.0
    %1269 = vmatmul.mubr.f32.gmra.mxu0 %v1187
    %v1270 = vpop.f32.mrf.mxu0
    %v1271 = vadd.f32 0.0, %v1270
    %v1272 = vpop.f32.mrf.mxu0
    %1273 = vdwg.mxu0
    %1274 = vmatprep.subr.mxu0 0.0
    %1275 = vmatpush1.msra.mxu0 0.0
    %1276 = vmatprep.subr.mxu0 0.0
    %1277 = vmatpush1.msra.mxu0 0.0
    %1278 = vmatprep.subr.mxu0 0.0
    %1279 = vmatpush1.msra.mxu0 0.0
    %1280 = vmatprep.subr.mxu0 0.0
    %1281 = vmatpush1.msra.mxu0 0.0
    %1282 = vmatprep.subr.mxu0 0.0
    %1283 = vmatpush1.msra.mxu0 0.0
    %1284 = vmatprep.subr.mxu0 0.0
    %1285 = vmatpush1.msra.mxu0 0.0
    %1286 = vmatprep.subr.mxu0 0.0
    %1287 = vmatpush1.msra.mxu0 0.0
    %1288 = vmatprep.subr.mxu0 0.0
    %1289 = vmatpush1.msra.mxu0 0.0
    %1290 = vmatprep.subr.mxu0 0.0
    %1291 = vmatpush1.msra.mxu0 0.0
    %1292 = vmatprep.subr.mxu0 0.0
    %1293 = vmatpush1.msra.mxu0 0.0
    %1294 = vmatprep.subr.mxu0 0.0
    %1295 = vmatpush1.msra.mxu0 0.0
    %1296 = vmatprep.subr.mxu0 0.0
    %1297 = vmatpush1.msra.mxu0 0.0
    %1298 = vmatprep.subr.mxu0 0.0
    %1299 = vmatpush1.msra.mxu0 %v1271
    %1300 = vmatprep.subr.mxu0 0.0
    %1301 = vmatpush1.msra.mxu0 %v1266
    %1302 = vmatprep.subr.mxu0 0.0
    %1303 = vmatpush1.msra.mxu0 %v1261
    %1304 = vmatprep.subr.mxu0 0.0
    %1305 = vmatpush1.msra.mxu0 %v1256
    %1306 = vmatprep.subr.mxu0 0.0
    %1307 = vmatpush2.msra.mxu0 0.0
    %1308 = vmatprep.subr.mxu0 0.0
    %1309 = vmatpush2.msra.mxu0 0.0
    %1310 = vmatprep.subr.mxu0 0.0
    %1311 = vmatpush2.msra.mxu0 0.0
    %1312 = vmatprep.subr.mxu0 0.0
    %1313 = vmatpush2.msra.mxu0 0.0
    %1314 = vmatprep.subr.mxu0 0.0
    %1315 = vmatpush2.msra.mxu0 0.0
    %1316 = vmatprep.subr.mxu0 0.0
    %1317 = vmatpush2.msra.mxu0 0.0
    %1318 = vmatprep.subr.mxu0 0.0
    %1319 = vmatpush2.msra.mxu0 0.0
    %1320 = vmatprep.subr.mxu0 0.0
    %1321 = vmatpush2.msra.mxu0 0.0
    %1322 = vmatprep.subr.mxu0 0.0
    %1323 = vmatpush2.msra.mxu0 0.0
    %1324 = vmatprep.subr.mxu0 0.0
    %1325 = vmatpush2.msra.mxu0 0.0
    %1326 = vmatprep.subr.mxu0 0.0
    %1327 = vmatpush2.msra.mxu0 0.0
    %1328 = vmatprep.subr.mxu0 0.0
    %1329 = vmatpush2.msra.mxu0 0.0
    %1330 = vmatprep.subr.mxu0 0.0
    %1331 = vmatpush2.msra.mxu0 0.0
    %1332 = vmatprep.subr.mxu0 0.0
    %1333 = vmatpush2.msra.mxu0 0.0
    %1334 = vmatprep.subr.mxu0 0.0
    %1335 = vmatpush2.msra.mxu0 0.0
    %1336 = vmatprep.subr.mxu0 0.0
    %1337 = vmatpush2.msra.mxu0 0.0
    %1338 = vmatprep.mubr.f32.mxu0 0.0
    %1339 = vmatmul.mubr.f32.gmra.mxu0 %v991
    %v1340 = vpop.f32.mrf.mxu0
    %v1341 = vadd.f32 0.0, %v1340
    %v1342 = vpop.f32.mrf.mxu0
    %1343 = vdwg.mxu0
    %v1344 = vmul.f32 %v1341, %v183
    %vm1345 = vcmask 27648
    %v1346 = vsel %vm1345, %v1344, 0.0
    %1347 = vadd.xlane.f32.xlu0 %v1346
    %v1348 = vpop.xlane.xlu0 %1347
    %v1349 = vmul.f32 %v1348, 0.015625
    %v1350 = vadd.f32 %v1349, %v751
    %v1351 = vmul.f32 %v1063, 2.0
    %v1352 = vsub.f32 %v1350, %v1351
    %v1353 = vmax.f32 %v1352, 0.0
    %v1354 = vrsqrt.pop %v1353
    %v1355 = vmul.f32 %v1353, %v1354
    %vm1356 = vcmp.eq.f32.partialorder %v1353, inf
    %v1357 = vsel %vm1356, %v1353, %v1355
    %vm1358 = vcmp.eq.f32.partialorder %v1353, 0.0
    %v1359 = vand.u32 %v1353, 2147483648
    %v1360 = vsel %vm1358, %v1359, %v1357
    %v1361 = vsub.f32 0.0, %v1360
    %v1362 = vmul.f32 %v1361, 1.442695
    %v1363 = vpow.pop %v1362
    %vm1364 = vcmask 19456
    %v1365 = vsel %vm1364, %v1363, 0.0
    %v1366 = vrot.slane %v1365, 4
    %v1367 = vadd.f32 %v1365, %v1366
    %v1368 = vrot.slane %v1367, 2
    %v1369 = vadd.f32 %v1367, %v1368
    %v1370 = vrot.slane %v1369, 1
    %v1371 = vadd.f32 %v1369, %v1370
    %v1372 = vrcp.pop %v1371
    %v1373 = vmul.f32 %v1363, %v1372
    %1374 = vst.msk [vmem:[#allocation3] sm:$0xf] %vm1364, %v1373
    // Predicated region
    $region26: #{tpu_custom_call.1} parent=1 // pred_check
      _
    $region27: #{tpu_custom_call.1} parent=1 // pred_check_branch
      %1376 = sbr.rel (0) target = $region29
    $region28: #{tpu_custom_call.1} parent=1 // pred_region
      %s1378 = ssub.s32 64, 64
      %1379 = vsyncadd [#allocation4], %s1378
      %s1381 = sshll.u32 [#allocation3], 4
      %s1382 = int_to_ptr.vmem [resolvable:$true] %s1381
      %1384 = dma.vmem_to_hbm [thread:$0]  %s1382, 64, %s6, [#allocation4]
    $region29: #{tpu_custom_call.1} parent=1 // pred_fallthru
      _
    // Predicated region
    $region30: #{tpu_custom_call.1} parent=1 // pred_check
      _
    $region31: #{tpu_custom_call.1} parent=1 // pred_check_branch
      %1386 = sbr.rel (0) target = $region33
    $region32: #{tpu_custom_call.1} parent=1 // pred_region
      %1387 = dma.done [#allocation4], 64
    $region33: #{tpu_custom_call.1} parent=1 // pred_fallthru
      _
    %1388 = vsyncpa [#allocation4], 1

</llo_original>
